<compile_context>
chip_gen: v7x
topology: tpu7x:2x2x1
jax: 0.10.0
libtpu: 0.0.40
codegen_flags: <defaults>
</compile_context>

<pallas_src>
import jax
import jax.numpy as jnp
from jax import lax
from jax.experimental import pallas as pl
from jax.experimental.pallas import tpu as pltpu

# ------------------------- synthetic model dims -------------------------
BINS = 8              # bins per coordinate axis (r_out_dim // 6)
N_COORD = 6           # stc_x/y/z + dyn_x/y/z
REGION_DIM = 8        # region classes (+ background)
MASK_DIM = 1
DEPTH_DIM = 1
W2D_DIM = 2
SCALE_DIM = 2
FEAT_DIM = 32         # backbone feature channels
OUT_RES = 16          # cfg.MODEL.CDPN.BACKBONE.OUTPUT_RES
IN_CH = 3

K_RAW = IN_CH * 9     # 27 im2col columns of the 3x3 conv
K_PAD = 32            # zero-padded to a lane/MXU friendly width

# channel layout of the (padded) rot-head output, channels-last
MASK_OFF = 0
BIN_OFF = MASK_OFF + MASK_DIM                 # 1
REGION_OFF = BIN_OFF + N_COORD * BINS         # 49
DEPTH_OFF = REGION_OFF + REGION_DIM           # 57
W2D_OFF = DEPTH_OFF + DEPTH_DIM               # 58
SCALE_OFF = W2D_OFF + W2D_DIM                 # 60
C_HEAD = SCALE_OFF + SCALE_DIM                # 62
C_PAD = 64                                    # zero-padded head width


# ----------------------------- fused Pallas kernel -----------------------------
def _fused_kernel(pm_ref, w_bb_ref, b_bb_ref, w_rot_ref, b_rot_ref,
                  w_tr_ref, b_tr_ref,
                  head_ref, trans_ref, scale_ref):
    rows = pm_ref.shape[0]                     # R * hw
    r_imgs = trans_ref.shape[1]                # images per grid step
    hw = rows // r_imgs
    inv_hw = 1.0 / float(hw)

    # ---- backbone: im2col'd 3x3 s2 conv as matmul + ReLU (bf16 MXU, f32 acc)
    feat = jnp.dot(pm_ref[...], w_bb_ref[...], preferred_element_type=jnp.float32)
    feat = jnp.maximum(feat + b_bb_ref[...], 0.0)                        # (R*hw, FEAT) f32

    # ---- rot head: 1x1 conv over all dense heads (padded to C_PAD lanes)
    head = jnp.dot(feat.astype(jnp.bfloat16), w_rot_ref[...],
                   preferred_element_type=jnp.float32) + b_rot_ref[...]   # (R*hw, C_PAD) f32
    head_ref[...] = head

    # ---- trans head: per-image global-avg-pool + FC  (hw is sublane-aligned)
    pooled = jnp.sum(feat.reshape(r_imgs, hw, FEAT_DIM), axis=1) * inv_hw     # (R, FEAT)
    trans_rows = jnp.dot(pooled, w_tr_ref[...],
                         preferred_element_type=jnp.float32) + b_tr_ref[...]  # (R, 3)
    trans_ref[...] = trans_rows.reshape(1, r_imgs, 3)

    # ---- 'scale' head: per-image spatial mean of the scale channels
    head_pool = jnp.sum(head.reshape(r_imgs, hw, C_PAD), axis=1) * inv_hw     # (R, C_PAD)
    scale_ref[...] = head_pool[:, SCALE_OFF:SCALE_OFF + SCALE_DIM].reshape(
        1, r_imgs, SCALE_DIM)


def _rows_per_step(bs, cap=8):
    """Largest divisor of bs that is <= cap (images per grid step)."""
    r = min(bs, cap)
    while bs % r:
        r -= 1
    return r


def fused_forward(pm, params, *, bs, hw):
    M = bs * hw
    r_imgs = _rows_per_step(bs)
    steps = bs // r_imgs
    tile_rows = r_imgs * hw

    cost = pl.CostEstimate(
        flops=2 * M * (K_PAD * FEAT_DIM + FEAT_DIM * C_PAD) + 2 * bs * FEAT_DIM * 3,
        transcendentals=0,
        bytes_accessed=(M * K_PAD * 2                             # pm (bf16)
                        + M * C_PAD * 4                           # head output (f32)
                        + (K_PAD * FEAT_DIM + FEAT_DIM * C_PAD) * 2
                        + (FEAT_DIM + C_PAD + 3) * 4
                        + bs * (3 + SCALE_DIM) * 4))

    head2d, trans3, scale3 = pl.pallas_call(
        _fused_kernel,
        out_shape=(
            jax.ShapeDtypeStruct((M, C_PAD), jnp.float32),               # head (channels-last)
            jax.ShapeDtypeStruct((steps, r_imgs, 3), jnp.float32),       # trans
            jax.ShapeDtypeStruct((steps, r_imgs, SCALE_DIM), jnp.float32),  # scale
        ),
        grid=(steps,),
        in_specs=[
            pl.BlockSpec((tile_rows, K_PAD), lambda s: (s, 0)),
            pl.BlockSpec((K_PAD, FEAT_DIM), lambda s: (0, 0)),
            pl.BlockSpec((1, FEAT_DIM), lambda s: (0, 0)),
            pl.BlockSpec((FEAT_DIM, C_PAD), lambda s: (0, 0)),
            pl.BlockSpec((1, C_PAD), lambda s: (0, 0)),
            pl.BlockSpec((FEAT_DIM, 3), lambda s: (0, 0)),
            pl.BlockSpec((1, 3), lambda s: (0, 0)),
        ],
        out_specs=(
            pl.BlockSpec((tile_rows, C_PAD), lambda s: (s, 0)),
            pl.BlockSpec((1, r_imgs, 3), lambda s: (s, 0, 0)),
            pl.BlockSpec((1, r_imgs, SCALE_DIM), lambda s: (s, 0, 0)),
        ),
        # Every output block is written by exactly one grid step -> parallel
        # (v7x can shard the batch axis across both TensorCores).
        compiler_params=pltpu.CompilerParams(dimension_semantics=("parallel",)),
        cost_estimate=cost,
    )(pm, params["w_bb"], params["b_bb"], params["w_rot"], params["b_rot"],
      params["w_trans"], params["b_trans"])

    return head2d, trans3.reshape(bs, 3), scale3.reshape(bs, SCALE_DIM)


# ------------------------------ params ------------------------------
def init_params(key):
    ks = jax.random.split(key, 3)

    def w(k, shape, fan_in):
        return jax.random.normal(k, shape, jnp.float32) / jnp.sqrt(fan_in)

    # zero-pad K 27->32 and C_head 62->64 so MXU tiles / stores are lane-dense;
    # padded rows/cols are exactly zero so channel offsets are unchanged.
    w_bb = jnp.zeros((K_PAD, FEAT_DIM), jnp.float32).at[:K_RAW].set(
        w(ks[0], (K_RAW, FEAT_DIM), float(K_RAW)))
    w_rot = jnp.zeros((FEAT_DIM, C_PAD), jnp.float32).at[:, :C_HEAD].set(
        w(ks[1], (FEAT_DIM, C_HEAD), float(FEAT_DIM)))
    return {
        "w_bb": w_bb.astype(jnp.bfloat16),
        "b_bb": jnp.zeros((1, FEAT_DIM), jnp.float32),
        "w_rot": w_rot.astype(jnp.bfloat16),
        "b_rot": jnp.zeros((1, C_PAD), jnp.float32),
        "w_trans": w(ks[2], (FEAT_DIM, 3), float(FEAT_DIM)),
        "b_trans": jnp.zeros((1, 3), jnp.float32),
    }


# ------------------------------ forward ------------------------------
def gdrnppnp_forward(params, x, roi_coord_2d=None):
    bs = x.shape[0]
    H = W = OUT_RES
    hw = H * W

    # im2col glue for the 3x3 stride-2 backbone conv (XLA); channels-last,
    # zero-padded 27->32 and cast to bf16 (MXU operands, f32 accumulation).
    patches = lax.conv_general_dilated_patches(x, (3, 3), (2, 2), "SAME")   # (bs, 27, H, W)
    pm = jnp.transpose(patches, (0, 2, 3, 1)).reshape(bs * hw, K_RAW)
    pm = jnp.pad(pm, ((0, 0), (0, K_PAD - K_RAW))).astype(jnp.bfloat16)

    head2d, trans, scale = fused_forward(pm, params, bs=bs, hw=hw)

    # single NCHW transpose for the returned dense heads; cheap channel slices after.
    head = jnp.transpose(head2d.reshape(bs, H, W, C_PAD), (0, 3, 1, 2))
    mask = head[:, MASK_OFF:MASK_OFF + MASK_DIM]
    bins = [head[:, BIN_OFF + g * BINS: BIN_OFF + (g + 1) * BINS] for g in range(N_COORD)]
    norm_stc_x, norm_stc_y, norm_stc_z, norm_dyn_x, norm_dyn_y, norm_dyn_z = bins
    depth = head[:, DEPTH_OFF:DEPTH_OFF + DEPTH_DIM]
    w2d = head[:, W2D_OFF:W2D_OFF + W2D_DIM]

    # TODO(synk): the PnP/SVD pre-processing in the reference forward
    # (per-axis bin softmaxes, region[:,1:] softmax, sigmoid mask attention,
    # coor_feat concat with roi_coord_2d) only feeds pnp_net / svd_net /
    # EProPnP6DoF / LMSolver / MonteCarloPoseLoss, all of which are disabled
    # or unused under this config and never reach out_dict -> intentionally
    # not materialized (was pure dead work in the previous kernel).
    del roi_coord_2d

    return {
        "mask": mask, "depth": depth,
        "norm_stc_x": norm_stc_x, "norm_stc_y": norm_stc_y, "norm_stc_z": norm_stc_z,
        "norm_dyn_x": norm_dyn_x, "norm_dyn_y": norm_dyn_y, "norm_dyn_z": norm_dyn_z,
        "w2d": w2d, "scale": scale, "trans": trans,
    }


if __name__ == "__main__":
    key = jax.random.PRNGKey(0)
    kx, kc, kp = jax.random.split(key, 3)
    x = jax.random.normal(kx, (2, IN_CH, 2 * OUT_RES, 2 * OUT_RES), jnp.float32)   # NCHW input
    roi_coord_2d = jax.random.normal(kc, (2, 2, OUT_RES, OUT_RES), jnp.float32)
    params = init_params(kp)

    out = jax.jit(gdrnppnp_forward)(params, x, roi_coord_2d)
    jax.block_until_ready(out)
    print("KERNEL_OK")
</pallas_src>

<mosaic_0001>
module attributes {stable_mosaic.version = 11 : i64} {
  func.func @_fused_kernel(%arg0: i32, %arg1: memref<512x32xbf16, #tpu.memory_space<vmem>>, %arg2: memref<32x32xbf16, #tpu.memory_space<vmem>>, %arg3: memref<1x32xf32, #tpu.memory_space<vmem>>, %arg4: memref<32x64xbf16, #tpu.memory_space<vmem>>, %arg5: memref<1x64xf32, #tpu.memory_space<vmem>>, %arg6: memref<32x3xf32, #tpu.memory_space<vmem>>, %arg7: memref<1x3xf32, #tpu.memory_space<vmem>>, %arg8: memref<512x64xf32, #tpu.memory_space<vmem>>, %arg9: memref<1x2x3xf32, #tpu.memory_space<vmem>>, %arg10: memref<1x2x2xf32, #tpu.memory_space<vmem>>) attributes {dimension_semantics = [#tpu.dimension_semantics<parallel>], iteration_bounds = array<i64: 1>, scalar_prefetch = 0 : i64, scratch_operands = 0 : i64, tpu.core_type = #tpu.core_type<tc>, window_params = [{transform_indices = @transform_0, window_bounds = array<i64: 512, 32>}, {pipeline_mode = #tpu.pipeline_mode<synchronous>, transform_indices = @transform_1, window_bounds = array<i64: 32, 32>}, {pipeline_mode = #tpu.pipeline_mode<synchronous>, transform_indices = @transform_2, window_bounds = array<i64: 1, 32>}, {pipeline_mode = #tpu.pipeline_mode<synchronous>, transform_indices = @transform_3, window_bounds = array<i64: 32, 64>}, {pipeline_mode = #tpu.pipeline_mode<synchronous>, transform_indices = @transform_4, window_bounds = array<i64: 1, 64>}, {pipeline_mode = #tpu.pipeline_mode<synchronous>, transform_indices = @transform_5, window_bounds = array<i64: 32, 3>}, {pipeline_mode = #tpu.pipeline_mode<synchronous>, transform_indices = @transform_6, window_bounds = array<i64: 1, 3>}, {transform_indices = @transform_7, window_bounds = array<i64: 512, 64>}, {transform_indices = @transform_8, window_bounds = array<i64: 1, 2, 3>}, {transform_indices = @transform_9, window_bounds = array<i64: 1, 2, 2>}]} {
    %c0 = arith.constant 0 : index
    %c0_0 = arith.constant 0 : index
    %0 = vector.load %arg1[%c0, %c0_0] : memref<512x32xbf16, #tpu.memory_space<vmem>>, vector<512x32xbf16>
    %c0_1 = arith.constant 0 : index
    %c0_2 = arith.constant 0 : index
    %1 = vector.load %arg2[%c0_1, %c0_2] : memref<32x32xbf16, #tpu.memory_space<vmem>>, vector<32x32xbf16>
    %cst = arith.constant dense<0.000000e+00> : vector<512x32xf32>
    %2 = tpu.matmul %0, %1, %cst {dimension_numbers = #tpu.dot_dimension_numbers<[1], [0], [0], [1], [0, 0, 1, 1], [], []>} : vector<512x32xbf16>, vector<32x32xbf16>, vector<512x32xf32> -> vector<512x32xf32>
    %c0_3 = arith.constant 0 : index
    %c0_4 = arith.constant 0 : index
    %3 = vector.load %arg3[%c0_3, %c0_4] : memref<1x32xf32, #tpu.memory_space<vmem>>, vector<1x32xf32>
    %4 = vector.broadcast %3 : vector<1x32xf32> to vector<512x32xf32>
    %5 = arith.addf %2, %4 : vector<512x32xf32>
    %cst_5 = arith.constant 0.000000e+00 : f32
    %6 = vector.broadcast %cst_5 : f32 to vector<512x32xf32>
    %7 = arith.maximumf %5, %6 : vector<512x32xf32>
    %8 = arith.truncf %7 : vector<512x32xf32> to vector<512x32xbf16>
    %c0_6 = arith.constant 0 : index
    %c0_7 = arith.constant 0 : index
    %9 = vector.load %arg4[%c0_6, %c0_7] : memref<32x64xbf16, #tpu.memory_space<vmem>>, vector<32x64xbf16>
    %cst_8 = arith.constant dense<0.000000e+00> : vector<512x64xf32>
    %10 = tpu.matmul %8, %9, %cst_8 {dimension_numbers = #tpu.dot_dimension_numbers<[1], [0], [0], [1], [0, 0, 1, 1], [], []>} : vector<512x32xbf16>, vector<32x64xbf16>, vector<512x64xf32> -> vector<512x64xf32>
    %c0_9 = arith.constant 0 : index
    %c0_10 = arith.constant 0 : index
    %11 = vector.load %arg5[%c0_9, %c0_10] : memref<1x64xf32, #tpu.memory_space<vmem>>, vector<1x64xf32>
    %12 = vector.broadcast %11 : vector<1x64xf32> to vector<512x64xf32>
    %13 = arith.addf %10, %12 : vector<512x64xf32>
    %c0_11 = arith.constant 0 : index
    %c0_12 = arith.constant 0 : index
    %14 = vector.load %arg8[%c0_11, %c0_12] : memref<512x64xf32, #tpu.memory_space<vmem>>, vector<512x64xf32>
    tpu.vector_store %arg8[%c0_11, %c0_12], %13 {strides = array<i32>} : memref<512x64xf32, #tpu.memory_space<vmem>>, vector<512x64xf32>,
    %15 = vector.shape_cast %7 : vector<512x32xf32> to vector<2x256x32xf32>
    %cst_13 = arith.constant dense<0.000000e+00> : vector<2x32xf32>
    %16 = vector.multi_reduction <add>, %15, %cst_13 [1] : vector<2x256x32xf32> to vector<2x32xf32>
    %cst_14 = arith.constant 3.906250e-03 : f32
    %17 = vector.broadcast %cst_14 : f32 to vector<2x32xf32>
    %18 = arith.mulf %16, %17 : vector<2x32xf32>
    %c0_15 = arith.constant 0 : index
    %c0_16 = arith.constant 0 : index
    %19 = vector.load %arg6[%c0_15, %c0_16] : memref<32x3xf32, #tpu.memory_space<vmem>>, vector<32x3xf32>
    %cst_17 = arith.constant dense<0.000000e+00> : vector<2x3xf32>
    %20 = tpu.matmul %18, %19, %cst_17 {dimension_numbers = #tpu.dot_dimension_numbers<[1], [0], [0], [1], [0, 0, 1, 1], [], []>} : vector<2x32xf32>, vector<32x3xf32>, vector<2x3xf32> -> vector<2x3xf32>
    %c0_18 = arith.constant 0 : index
    %c0_19 = arith.constant 0 : index
    %21 = vector.load %arg7[%c0_18, %c0_19] : memref<1x3xf32, #tpu.memory_space<vmem>>, vector<1x3xf32>
    %22 = vector.broadcast %21 : vector<1x3xf32> to vector<2x3xf32>
    %23 = arith.addf %20, %22 : vector<2x3xf32>
    %24 = vector.shape_cast %23 : vector<2x3xf32> to vector<1x2x3xf32>
    %c0_20 = arith.constant 0 : index
    %c0_21 = arith.constant 0 : index
    %c0_22 = arith.constant 0 : index
    %25 = vector.load %arg9[%c0_20, %c0_21, %c0_22] : memref<1x2x3xf32, #tpu.memory_space<vmem>>, vector<1x2x3xf32>
    tpu.vector_store %arg9[%c0_20, %c0_21, %c0_22], %24 {strides = array<i32>} : memref<1x2x3xf32, #tpu.memory_space<vmem>>, vector<1x2x3xf32>,
    %26 = vector.shape_cast %13 : vector<512x64xf32> to vector<2x256x64xf32>
    %cst_23 = arith.constant dense<0.000000e+00> : vector<2x64xf32>
    %27 = vector.multi_reduction <add>, %26, %cst_23 [1] : vector<2x256x64xf32> to vector<2x64xf32>
    %cst_24 = arith.constant 3.906250e-03 : f32
    %28 = vector.broadcast %cst_24 : f32 to vector<2x64xf32>
    %29 = arith.mulf %27, %28 : vector<2x64xf32>
    %30 = vector.extract_strided_slice %29 {offsets = [0, 60], sizes = [2, 2], strides = [1, 1]} : vector<2x64xf32> to vector<2x2xf32>
    %31 = vector.shape_cast %30 : vector<2x2xf32> to vector<1x2x2xf32>
    %c0_25 = arith.constant 0 : index
    %c0_26 = arith.constant 0 : index
    %c0_27 = arith.constant 0 : index
    %32 = vector.load %arg10[%c0_25, %c0_26, %c0_27] : memref<1x2x2xf32, #tpu.memory_space<vmem>>, vector<1x2x2xf32>
    tpu.vector_store %arg10[%c0_25, %c0_26, %c0_27], %31 {strides = array<i32>} : memref<1x2x2xf32, #tpu.memory_space<vmem>>, vector<1x2x2xf32>,
    return
  }
  func.func @transform_0(%arg0: i32) -> (i32, i32) {
    %c0_i32 = arith.constant 0 : i32
    %c0_i32_0 = arith.constant 0 : i32
    return %arg0, %c0_i32 : i32, i32
  }
  func.func @transform_1(%arg0: i32) -> (i32, i32) {
    %c0_i32 = arith.constant 0 : i32
    %c0_i32_0 = arith.constant 0 : i32
    %c0_i32_1 = arith.constant 0 : i32
    return %c0_i32, %c0_i32_0 : i32, i32
  }
  func.func @transform_2(%arg0: i32) -> (i32, i32) {
    %c0_i32 = arith.constant 0 : i32
    %c0_i32_0 = arith.constant 0 : i32
    %c0_i32_1 = arith.constant 0 : i32
    return %c0_i32, %c0_i32_0 : i32, i32
  }
  func.func @transform_3(%arg0: i32) -> (i32, i32) {
    %c0_i32 = arith.constant 0 : i32
    %c0_i32_0 = arith.constant 0 : i32
    %c0_i32_1 = arith.constant 0 : i32
    return %c0_i32, %c0_i32_0 : i32, i32
  }
  func.func @transform_4(%arg0: i32) -> (i32, i32) {
    %c0_i32 = arith.constant 0 : i32
    %c0_i32_0 = arith.constant 0 : i32
    %c0_i32_1 = arith.constant 0 : i32
    return %c0_i32, %c0_i32_0 : i32, i32
  }
  func.func @transform_5(%arg0: i32) -> (i32, i32) {
    %c0_i32 = arith.constant 0 : i32
    %c0_i32_0 = arith.constant 0 : i32
    %c0_i32_1 = arith.constant 0 : i32
    return %c0_i32, %c0_i32_0 : i32, i32
  }
  func.func @transform_6(%arg0: i32) -> (i32, i32) {
    %c0_i32 = arith.constant 0 : i32
    %c0_i32_0 = arith.constant 0 : i32
    %c0_i32_1 = arith.constant 0 : i32
    return %c0_i32, %c0_i32_0 : i32, i32
  }
  func.func @transform_7(%arg0: i32) -> (i32, i32) {
    %c0_i32 = arith.constant 0 : i32
    %c0_i32_0 = arith.constant 0 : i32
    return %arg0, %c0_i32 : i32, i32
  }
  func.func @transform_8(%arg0: i32) -> (i32, i32, i32) {
    %c0_i32 = arith.constant 0 : i32
    %c0_i32_0 = arith.constant 0 : i32
    %c0_i32_1 = arith.constant 0 : i32
    return %arg0, %c0_i32, %c0_i32_0 : i32, i32, i32
  }
  func.func @transform_9(%arg0: i32) -> (i32, i32, i32) {
    %c0_i32 = arith.constant 0 : i32
    %c0_i32_0 = arith.constant 0 : i32
    %c0_i32_1 = arith.constant 0 : i32
    return %arg0, %c0_i32, %c0_i32_0 : i32, i32, i32
  }
}

</mosaic_0001>

<llo_original>
// kernel: gdrnppnp_forward.1
$region0: #{gdrnppnp_forward.1}
  #allocation0 [shape = 'u32[]', space=smem, size = 0x4, offset = 0x4, fixed_abs, tag = 'smem constant byte address 0x4 - core index']
  #allocation1 [shape = 'u32[144,128]{1,0:T(1,128)}', space=vmem, size = 0x12000, scoped, tag = 'internal scratch']
  %s0 = inlined_call_operand.vmem [shape: bf16[512,32], index: 0, kind: input, shape index: {}]
  %s1 = inlined_call_operand.vmem [shape: bf16[32,32], index: 1, kind: input, shape index: {}]
  %s2 = inlined_call_operand.vmem [shape: f32[1,32], index: 2, kind: input, shape index: {}]
  %s3 = inlined_call_operand.vmem [shape: bf16[32,64], index: 3, kind: input, shape index: {}]
  %s4 = inlined_call_operand.vmem [shape: f32[1,64], index: 4, kind: input, shape index: {}]
  %s5 = inlined_call_operand.vmem [shape: f32[32,3], index: 5, kind: input, shape index: {}]
  %s6 = inlined_call_operand.vmem [shape: f32[1,3], index: 6, kind: input, shape index: {}]
  %s7 = inlined_call_operand.vmem [shape: f32[512,64], index: 7, kind: output, shape index: {0}]
  %s8 = inlined_call_operand.hbm [shape: f32[1,2,3], index: 8, kind: output, shape index: {1}]
  %s9 = inlined_call_operand.hbm [shape: f32[1,2,2], index: 9, kind: output, shape index: {2}]
  %10 = xla_tuple %s7, %s8, %s9
  %s11 = sld [smem:[#allocation0]]
  $region54: #{gdrnppnp_forward.1} parent=0
    _
  %s13 = ssub.s32 1, %s11
  %s14 = scalar_select 0, %s13, %s11
  $region1: #{gdrnppnp_forward.1} parent=0
    #allocation2 [shape = 'u8[1024]{0}', space=vmem, size = 0x400, scoped, tag = 'output window, operand 1, single buffered']
    #allocation3 [shape = 's32[1]{0}', space=sflag, size = 0x4, scoped, tag = 'scoped memory for gdrnppnp_forward.1']
    #allocation4 [shape = 'u8[1024]{0}', space=vmem, size = 0x400, scoped, tag = 'output window, operand 2, single buffered']
    #allocation5 [shape = 's32[1]{0}', space=sflag, size = 0x4, scoped, tag = 'scoped memory for gdrnppnp_forward.1']
    %15 = vsyncpa [#allocation3], 0
    %16 = vsyncpa [#allocation5], 0
    // Predicated region
    $region2: #{gdrnppnp_forward.1} parent=1 // pred_check
      _
    $region3: #{gdrnppnp_forward.1} parent=1 // pred_check_branch
      %18 = sbr.rel (0) target = $region5
    $region4: #{gdrnppnp_forward.1} parent=1 // pred_region
      _
    $region5: #{gdrnppnp_forward.1} parent=1 // pred_fallthru
      _
    // Predicated region
    $region6: #{gdrnppnp_forward.1} parent=1 // pred_check
      _
    $region7: #{gdrnppnp_forward.1} parent=1 // pred_check_branch
      %20 = sbr.rel (0) target = $region9
    $region8: #{gdrnppnp_forward.1} parent=1 // pred_region
      _
    $region9: #{gdrnppnp_forward.1} parent=1 // pred_fallthru
      _
    // Predicated region
    $region10: #{gdrnppnp_forward.1} parent=1 // pred_check
      _
    $region11: #{gdrnppnp_forward.1} parent=1 // pred_check_branch
      %22 = sbr.rel (0) target = $region13
    $region12: #{gdrnppnp_forward.1} parent=1 // pred_region
      _
    $region13: #{gdrnppnp_forward.1} parent=1 // pred_fallthru
      _
    // Predicated region
    $region14: #{gdrnppnp_forward.1} parent=1 // pred_check
      _
    $region15: #{gdrnppnp_forward.1} parent=1 // pred_check_branch
      %24 = sbr.rel (0) target = $region17
    $region16: #{gdrnppnp_forward.1} parent=1 // pred_region
      _
    $region17: #{gdrnppnp_forward.1} parent=1 // pred_fallthru
      _
    // Predicated region
    $region18: #{gdrnppnp_forward.1} parent=1 // pred_check
      _
    $region19: #{gdrnppnp_forward.1} parent=1 // pred_check_branch
      %26 = sbr.rel (0) target = $region21
    $region20: #{gdrnppnp_forward.1} parent=1 // pred_region
      _
    $region21: #{gdrnppnp_forward.1} parent=1 // pred_fallthru
      _
    // Predicated region
    $region22: #{gdrnppnp_forward.1} parent=1 // pred_check
      _
    $region23: #{gdrnppnp_forward.1} parent=1 // pred_check_branch
      %28 = sbr.rel (0) target = $region25
    $region24: #{gdrnppnp_forward.1} parent=1 // pred_region
      _
    $region25: #{gdrnppnp_forward.1} parent=1 // pred_fallthru
      _
    // Predicated region
    $region26: #{gdrnppnp_forward.1} parent=1 // pred_check
      _
    $region27: #{gdrnppnp_forward.1} parent=1 // pred_check_branch
      %30 = sbr.rel (0) target = $region29
    $region28: #{gdrnppnp_forward.1} parent=1 // pred_region
      _
    $region29: #{gdrnppnp_forward.1} parent=1 // pred_fallthru
      _
    %v32 = vld [vmem:[%s0] sm:$0xf]
    %v33 = vld [vmem:[%s0 + $0x4] sm:$0xf]
    %v34 = vld [vmem:[%s0 + $0x8] sm:$0xf]
    %v35 = vld [vmem:[%s0 + $0xc] sm:$0xf]
    %v36 = vld [vmem:[%s0 + $0x10] sm:$0xf]
    %v37 = vld [vmem:[%s0 + $0x14] sm:$0xf]
    %v38 = vld [vmem:[%s0 + $0x18] sm:$0xf]
    %v39 = vld [vmem:[%s0 + $0x1c] sm:$0xf]
    %v40 = vld [vmem:[%s0 + $0x20] sm:$0xf]
    %v41 = vld [vmem:[%s0 + $0x24] sm:$0xf]
    %v42 = vld [vmem:[%s0 + $0x28] sm:$0xf]
    %v43 = vld [vmem:[%s0 + $0x2c] sm:$0xf]
    %v44 = vld [vmem:[%s0 + $0x30] sm:$0xf]
    %v45 = vld [vmem:[%s0 + $0x34] sm:$0xf]
    %v46 = vld [vmem:[%s0 + $0x38] sm:$0xf]
    %v47 = vld [vmem:[%s0 + $0x3c] sm:$0xf]
    %v48 = vld [vmem:[%s0 + $0x40] sm:$0xf]
    %v49 = vld [vmem:[%s0 + $0x44] sm:$0xf]
    %v50 = vld [vmem:[%s0 + $0x48] sm:$0xf]
    %v51 = vld [vmem:[%s0 + $0x4c] sm:$0xf]
    %v52 = vld [vmem:[%s0 + $0x50] sm:$0xf]
    %v53 = vld [vmem:[%s0 + $0x54] sm:$0xf]
    %v54 = vld [vmem:[%s0 + $0x58] sm:$0xf]
    %v55 = vld [vmem:[%s0 + $0x5c] sm:$0xf]
    %v56 = vld [vmem:[%s0 + $0x60] sm:$0xf]
    %v57 = vld [vmem:[%s0 + $0x64] sm:$0xf]
    %v58 = vld [vmem:[%s0 + $0x68] sm:$0xf]
    %v59 = vld [vmem:[%s0 + $0x6c] sm:$0xf]
    %v60 = vld [vmem:[%s0 + $0x70] sm:$0xf]
    %v61 = vld [vmem:[%s0 + $0x74] sm:$0xf]
    %v62 = vld [vmem:[%s0 + $0x78] sm:$0xf]
    %v63 = vld [vmem:[%s0 + $0x7c] sm:$0xf]
    %v64 = vld [vmem:[%s0 + $0x80] sm:$0xf]
    %v65 = vld [vmem:[%s0 + $0x84] sm:$0xf]
    %v66 = vld [vmem:[%s0 + $0x88] sm:$0xf]
    %v67 = vld [vmem:[%s0 + $0x8c] sm:$0xf]
    %v68 = vld [vmem:[%s0 + $0x90] sm:$0xf]
    %v69 = vld [vmem:[%s0 + $0x94] sm:$0xf]
    %v70 = vld [vmem:[%s0 + $0x98] sm:$0xf]
    %v71 = vld [vmem:[%s0 + $0x9c] sm:$0xf]
    %v72 = vld [vmem:[%s0 + $0xa0] sm:$0xf]
    %v73 = vld [vmem:[%s0 + $0xa4] sm:$0xf]
    %v74 = vld [vmem:[%s0 + $0xa8] sm:$0xf]
    %v75 = vld [vmem:[%s0 + $0xac] sm:$0xf]
    %v76 = vld [vmem:[%s0 + $0xb0] sm:$0xf]
    %v77 = vld [vmem:[%s0 + $0xb4] sm:$0xf]
    %v78 = vld [vmem:[%s0 + $0xb8] sm:$0xf]
    %v79 = vld [vmem:[%s0 + $0xbc] sm:$0xf]
    %v80 = vld [vmem:[%s0 + $0xc0] sm:$0xf]
    %v81 = vld [vmem:[%s0 + $0xc4] sm:$0xf]
    %v82 = vld [vmem:[%s0 + $0xc8] sm:$0xf]
    %v83 = vld [vmem:[%s0 + $0xcc] sm:$0xf]
    %v84 = vld [vmem:[%s0 + $0xd0] sm:$0xf]
    %v85 = vld [vmem:[%s0 + $0xd4] sm:$0xf]
    %v86 = vld [vmem:[%s0 + $0xd8] sm:$0xf]
    %v87 = vld [vmem:[%s0 + $0xdc] sm:$0xf]
    %v88 = vld [vmem:[%s0 + $0xe0] sm:$0xf]
    %v89 = vld [vmem:[%s0 + $0xe4] sm:$0xf]
    %v90 = vld [vmem:[%s0 + $0xe8] sm:$0xf]
    %v91 = vld [vmem:[%s0 + $0xec] sm:$0xf]
    %v92 = vld [vmem:[%s0 + $0xf0] sm:$0xf]
    %v93 = vld [vmem:[%s0 + $0xf4] sm:$0xf]
    %v94 = vld [vmem:[%s0 + $0xf8] sm:$0xf]
    %v95 = vld [vmem:[%s0 + $0xfc] sm:$0xf]
    %v96 = vld [vmem:[%s1] sm:$0xf]
    %v97 = vld [vmem:[%s1 + $0x4] sm:$0xf]
    %v98 = vld [vmem:[%s1 + $0x8] sm:$0xf]
    %v99 = vld [vmem:[%s1 + $0xc] sm:$0xf]
    %v100 = vld [vmem:[%s2] sm:$0x1]
    %v102 = vlaneseq
    %v103 = vshrl.u32 %v102, 7
    %v104 = vsub.s32 0, %v103
    %v105 = vrot.slane %v100, %v104
    %v171 = vunpack.c.l.b16 %v32
    %v172 = vunpack.c.l.b16 %v33
    %v173 = vunpack.c.l.b16 %v34
    %v174 = vunpack.c.l.b16 %v35
    %v175 = vunpack.c.l.b16 %v36
    %v176 = vunpack.c.l.b16 %v37
    %v177 = vunpack.c.l.b16 %v38
    %v178 = vunpack.c.l.b16 %v39
    %v179 = vunpack.c.l.b16 %v40
    %v180 = vunpack.c.l.b16 %v41
    %v181 = vunpack.c.l.b16 %v42
    %v182 = vunpack.c.l.b16 %v43
    %v183 = vunpack.c.l.b16 %v44
    %v184 = vunpack.c.l.b16 %v45
    %v185 = vunpack.c.l.b16 %v46
    %v186 = vunpack.c.l.b16 %v47
    %v187 = vunpack.c.l.b16 %v48
    %v188 = vunpack.c.l.b16 %v49
    %v189 = vunpack.c.l.b16 %v50
    %v190 = vunpack.c.l.b16 %v51
    %v191 = vunpack.c.l.b16 %v52
    %v192 = vunpack.c.l.b16 %v53
    %v193 = vunpack.c.l.b16 %v54
    %v194 = vunpack.c.l.b16 %v55
    %v195 = vunpack.c.l.b16 %v56
    %v196 = vunpack.c.l.b16 %v57
    %v197 = vunpack.c.l.b16 %v58
    %v198 = vunpack.c.l.b16 %v59
    %v199 = vunpack.c.l.b16 %v60
    %v200 = vunpack.c.l.b16 %v61
    %v201 = vunpack.c.l.b16 %v62
    %v202 = vunpack.c.l.b16 %v63
    %v203 = vunpack.c.l.b16 %v64
    %v204 = vunpack.c.l.b16 %v65
    %v205 = vunpack.c.l.b16 %v66
    %v206 = vunpack.c.l.b16 %v67
    %v207 = vunpack.c.l.b16 %v68
    %v208 = vunpack.c.l.b16 %v69
    %v209 = vunpack.c.l.b16 %v70
    %v210 = vunpack.c.l.b16 %v71
    %v211 = vunpack.c.l.b16 %v72
    %v212 = vunpack.c.l.b16 %v73
    %v213 = vunpack.c.l.b16 %v74
    %v214 = vunpack.c.l.b16 %v75
    %v215 = vunpack.c.l.b16 %v76
    %v216 = vunpack.c.l.b16 %v77
    %v217 = vunpack.c.l.b16 %v78
    %v218 = vunpack.c.l.b16 %v79
    %v219 = vunpack.c.l.b16 %v80
    %v220 = vunpack.c.l.b16 %v81
    %v221 = vunpack.c.l.b16 %v82
    %v222 = vunpack.c.l.b16 %v83
    %v223 = vunpack.c.l.b16 %v84
    %v224 = vunpack.c.l.b16 %v85
    %v225 = vunpack.c.l.b16 %v86
    %v226 = vunpack.c.l.b16 %v87
    %v227 = vunpack.c.l.b16 %v88
    %v228 = vunpack.c.l.b16 %v89
    %v229 = vunpack.c.l.b16 %v90
    %v230 = vunpack.c.l.b16 %v91
    %v231 = vunpack.c.l.b16 %v92
    %v232 = vunpack.c.l.b16 %v93
    %v233 = vunpack.c.l.b16 %v94
    %v234 = vunpack.c.l.b16 %v95
    %v235 = vpack.c.b16 %v172, %v171
    %v236 = vpack.c.b16 %v174, %v173
    %v237 = vpack.c.b16 %v176, %v175
    %v238 = vpack.c.b16 %v178, %v177
    %v239 = vpack.c.b16 %v180, %v179
    %v240 = vpack.c.b16 %v182, %v181
    %v241 = vpack.c.b16 %v184, %v183
    %v242 = vpack.c.b16 %v186, %v185
    %v243 = vpack.c.b16 %v188, %v187
    %v244 = vpack.c.b16 %v190, %v189
    %v245 = vpack.c.b16 %v192, %v191
    %v246 = vpack.c.b16 %v194, %v193
    %v247 = vpack.c.b16 %v196, %v195
    %v248 = vpack.c.b16 %v198, %v197
    %v249 = vpack.c.b16 %v200, %v199
    %v250 = vpack.c.b16 %v202, %v201
    %v251 = vpack.c.b16 %v204, %v203
    %v252 = vpack.c.b16 %v206, %v205
    %v253 = vpack.c.b16 %v208, %v207
    %v254 = vpack.c.b16 %v210, %v209
    %v255 = vpack.c.b16 %v212, %v211
    %v256 = vpack.c.b16 %v214, %v213
    %v257 = vpack.c.b16 %v216, %v215
    %v258 = vpack.c.b16 %v218, %v217
    %v259 = vpack.c.b16 %v220, %v219
    %v260 = vpack.c.b16 %v222, %v221
    %v261 = vpack.c.b16 %v224, %v223
    %v262 = vpack.c.b16 %v226, %v225
    %v263 = vpack.c.b16 %v228, %v227
    %v264 = vpack.c.b16 %v230, %v229
    %v265 = vpack.c.b16 %v232, %v231
    %v266 = vpack.c.b16 %v234, %v233
    %v271 = vunpack.c.l.b16 %v96
    %v272 = vunpack.c.l.b16 %v97
    %v273 = vunpack.c.l.b16 %v98
    %v274 = vunpack.c.l.b16 %v99
    %v275 = vpack.c.b16 %v272, %v271
    %v276 = vpack.c.b16 %v274, %v273
    %vm279 = vcmask 261120
    %v281 = vsel %vm279, %v235, 0
    %v284 = vsel %vm279, %v236, 0
    %v287 = vsel %vm279, %v237, 0
    %v290 = vsel %vm279, %v238, 0
    %v293 = vsel %vm279, %v239, 0
    %v296 = vsel %vm279, %v240, 0
    %v299 = vsel %vm279, %v241, 0
    %v302 = vsel %vm279, %v242, 0
    %v305 = vsel %vm279, %v243, 0
    %v308 = vsel %vm279, %v244, 0
    %v311 = vsel %vm279, %v245, 0
    %v314 = vsel %vm279, %v246, 0
    %v317 = vsel %vm279, %v247, 0
    %v320 = vsel %vm279, %v248, 0
    %v323 = vsel %vm279, %v249, 0
    %v326 = vsel %vm279, %v250, 0
    %v329 = vsel %vm279, %v251, 0
    %v332 = vsel %vm279, %v252, 0
    %v335 = vsel %vm279, %v253, 0
    %v338 = vsel %vm279, %v254, 0
    %v341 = vsel %vm279, %v255, 0
    %v344 = vsel %vm279, %v256, 0
    %v347 = vsel %vm279, %v257, 0
    %v350 = vsel %vm279, %v258, 0
    %v353 = vsel %vm279, %v259, 0
    %v356 = vsel %vm279, %v260, 0
    %v359 = vsel %vm279, %v261, 0
    %v362 = vsel %vm279, %v262, 0
    %v365 = vsel %vm279, %v263, 0
    %v368 = vsel %vm279, %v264, 0
    %v371 = vsel %vm279, %v265, 0
    %v374 = vsel %vm279, %v266, 0
    %376 = vmatprep.subr.bf16.mxu0 0
    %377 = vmatpush1.bf16.msra.mxu0 %v275
    %378 = vmatprep.subr.bf16.mxu0 0
    %379 = vmatpush1.bf16.msra.mxu0 %v276
    %380 = vmatprep.subr.bf16.mxu0 0
    %381 = vmatpush1.bf16.msra.mxu0 0
    %382 = vmatprep.subr.bf16.mxu0 0
    %383 = vmatpush1.bf16.msra.mxu0 0
    %384 = vmatprep.subr.bf16.mxu0 0
    %385 = vmatpush1.bf16.msra.mxu0 0
    %386 = vmatprep.subr.bf16.mxu0 0
    %387 = vmatpush1.bf16.msra.mxu0 0
    %388 = vmatprep.subr.bf16.mxu0 0
    %389 = vmatpush1.bf16.msra.mxu0 0
    %390 = vmatprep.subr.bf16.mxu0 0
    %391 = vmatpush1.bf16.msra.mxu0 0
    %392 = vmatprep.subr.bf16.mxu0 0
    %393 = vmatpush1.bf16.msra.mxu0 0
    %394 = vmatprep.subr.bf16.mxu0 0
    %395 = vmatpush1.bf16.msra.mxu0 0
    %396 = vmatprep.subr.bf16.mxu0 0
    %397 = vmatpush1.bf16.msra.mxu0 0
    %398 = vmatprep.subr.bf16.mxu0 0
    %399 = vmatpush1.bf16.msra.mxu0 0
    %400 = vmatprep.subr.bf16.mxu0 0
    %401 = vmatpush1.bf16.msra.mxu0 0
    %402 = vmatprep.subr.bf16.mxu0 0
    %403 = vmatpush1.bf16.msra.mxu0 0
    %404 = vmatprep.subr.bf16.mxu0 0
    %405 = vmatpush1.bf16.msra.mxu0 0
    %406 = vmatprep.subr.bf16.mxu0 0
    %407 = vmatpush1.bf16.msra.mxu0 0
    %408 = vmatprep.mubr.bf16.mxu0 0
    %409 = vmatmul.mubr.bf16.gmra.mrb[0].mxu0 %v281
    %v410 = vpop.f32.mrb[0].mxu0
    %v411 = vadd.f32 %v105, %v410
    %v412 = vpop.f32.mrb[0].mxu0
    %v413 = vpop.f32.mrb[0].mxu0
    %v414 = vadd.f32 %v105, %v413
    %v415 = vpop.f32.mrb[0].mxu0
    %416 = vmatprep.mubr.bf16.mxu0 0
    %417 = vmatmul.mubr.bf16.gmra.mrb[0].mxu0 %v284
    %v418 = vpop.f32.mrb[0].mxu0
    %v419 = vadd.f32 %v105, %v418
    %v420 = vpop.f32.mrb[0].mxu0
    %v421 = vpop.f32.mrb[0].mxu0
    %v422 = vadd.f32 %v105, %v421
    %v423 = vpop.f32.mrb[0].mxu0
    %424 = vmatprep.mubr.bf16.mxu0 0
    %425 = vmatmul.mubr.bf16.gmra.mrb[0].mxu0 %v287
    %v426 = vpop.f32.mrb[0].mxu0
    %v427 = vadd.f32 %v105, %v426
    %v428 = vpop.f32.mrb[0].mxu0
    %v429 = vpop.f32.mrb[0].mxu0
    %v430 = vadd.f32 %v105, %v429
    %v431 = vpop.f32.mrb[0].mxu0
    %432 = vmatprep.mubr.bf16.mxu0 0
    %433 = vmatmul.mubr.bf16.gmra.mrb[0].mxu0 %v290
    %v434 = vpop.f32.mrb[0].mxu0
    %v435 = vadd.f32 %v105, %v434
    %v436 = vpop.f32.mrb[0].mxu0
    %v437 = vpop.f32.mrb[0].mxu0
    %v438 = vadd.f32 %v105, %v437
    %v439 = vpop.f32.mrb[0].mxu0
    %440 = vmatprep.mubr.bf16.mxu0 0
    %441 = vmatmul.mubr.bf16.gmra.mrb[0].mxu0 %v293
    %v442 = vpop.f32.mrb[0].mxu0
    %v443 = vadd.f32 %v105, %v442
    %v444 = vpop.f32.mrb[0].mxu0
    %v445 = vpop.f32.mrb[0].mxu0
    %v446 = vadd.f32 %v105, %v445
    %v447 = vpop.f32.mrb[0].mxu0
    %448 = vmatprep.mubr.bf16.mxu0 0
    %449 = vmatmul.mubr.bf16.gmra.mrb[0].mxu0 %v296
    %v450 = vpop.f32.mrb[0].mxu0
    %v451 = vadd.f32 %v105, %v450
    %v452 = vpop.f32.mrb[0].mxu0
    %v453 = vpop.f32.mrb[0].mxu0
    %v454 = vadd.f32 %v105, %v453
    %v455 = vpop.f32.mrb[0].mxu0
    %456 = vmatprep.mubr.bf16.mxu0 0
    %457 = vmatmul.mubr.bf16.gmra.mrb[0].mxu0 %v299
    %v458 = vpop.f32.mrb[0].mxu0
    %v459 = vadd.f32 %v105, %v458
    %v460 = vpop.f32.mrb[0].mxu0
    %v461 = vpop.f32.mrb[0].mxu0
    %v462 = vadd.f32 %v105, %v461
    %v463 = vpop.f32.mrb[0].mxu0
    %464 = vmatprep.mubr.bf16.mxu0 0
    %465 = vmatmul.mubr.bf16.gmra.mrb[0].mxu0 %v302
    %v466 = vpop.f32.mrb[0].mxu0
    %v467 = vadd.f32 %v105, %v466
    %v468 = vpop.f32.mrb[0].mxu0
    %v469 = vpop.f32.mrb[0].mxu0
    %v470 = vadd.f32 %v105, %v469
    %v471 = vpop.f32.mrb[0].mxu0
    %472 = vmatprep.mubr.bf16.mxu0 0
    %473 = vmatmul.mubr.bf16.gmra.mrb[0].mxu0 %v305
    %v474 = vpop.f32.mrb[0].mxu0
    %v475 = vadd.f32 %v105, %v474
    %v476 = vpop.f32.mrb[0].mxu0
    %v477 = vpop.f32.mrb[0].mxu0
    %v478 = vadd.f32 %v105, %v477
    %v479 = vpop.f32.mrb[0].mxu0
    %480 = vmatprep.mubr.bf16.mxu0 0
    %481 = vmatmul.mubr.bf16.gmra.mrb[0].mxu0 %v308
    %v482 = vpop.f32.mrb[0].mxu0
    %v483 = vadd.f32 %v105, %v482
    %v484 = vpop.f32.mrb[0].mxu0
    %v485 = vpop.f32.mrb[0].mxu0
    %v486 = vadd.f32 %v105, %v485
    %v487 = vpop.f32.mrb[0].mxu0
    %488 = vmatprep.mubr.bf16.mxu0 0
    %489 = vmatmul.mubr.bf16.gmra.mrb[0].mxu0 %v311
    %v490 = vpop.f32.mrb[0].mxu0
    %v491 = vadd.f32 %v105, %v490
    %v492 = vpop.f32.mrb[0].mxu0
    %v493 = vpop.f32.mrb[0].mxu0
    %v494 = vadd.f32 %v105, %v493
    %v495 = vpop.f32.mrb[0].mxu0
    %496 = vmatprep.mubr.bf16.mxu0 0
    %497 = vmatmul.mubr.bf16.gmra.mrb[0].mxu0 %v314
    %v498 = vpop.f32.mrb[0].mxu0
    %v499 = vadd.f32 %v105, %v498
    %v500 = vpop.f32.mrb[0].mxu0
    %v501 = vpop.f32.mrb[0].mxu0
    %v502 = vadd.f32 %v105, %v501
    %v503 = vpop.f32.mrb[0].mxu0
    %504 = vmatprep.mubr.bf16.mxu0 0
    %505 = vmatmul.mubr.bf16.gmra.mrb[0].mxu0 %v317
    %v506 = vpop.f32.mrb[0].mxu0
    %v507 = vadd.f32 %v105, %v506
    %v508 = vpop.f32.mrb[0].mxu0
    %v509 = vpop.f32.mrb[0].mxu0
    %v510 = vadd.f32 %v105, %v509
    %v511 = vpop.f32.mrb[0].mxu0
    %512 = vmatprep.mubr.bf16.mxu0 0
    %513 = vmatmul.mubr.bf16.gmra.mrb[0].mxu0 %v320
    %v514 = vpop.f32.mrb[0].mxu0
    %v515 = vadd.f32 %v105, %v514
    %v516 = vpop.f32.mrb[0].mxu0
    %v517 = vpop.f32.mrb[0].mxu0
    %v518 = vadd.f32 %v105, %v517
    %v519 = vpop.f32.mrb[0].mxu0
    %520 = vmatprep.mubr.bf16.mxu0 0
    %521 = vmatmul.mubr.bf16.gmra.mrb[0].mxu0 %v323
    %v522 = vpop.f32.mrb[0].mxu0
    %v523 = vadd.f32 %v105, %v522
    %v524 = vpop.f32.mrb[0].mxu0
    %v525 = vpop.f32.mrb[0].mxu0
    %v526 = vadd.f32 %v105, %v525
    %v527 = vpop.f32.mrb[0].mxu0
    %528 = vmatprep.mubr.bf16.mxu0 0
    %529 = vmatmul.mubr.bf16.gmra.mrb[0].mxu0 %v326
    %v530 = vpop.f32.mrb[0].mxu0
    %v531 = vadd.f32 %v105, %v530
    %v532 = vpop.f32.mrb[0].mxu0
    %v533 = vpop.f32.mrb[0].mxu0
    %v534 = vadd.f32 %v105, %v533
    %v535 = vpop.f32.mrb[0].mxu0
    %536 = vmatprep.mubr.bf16.mxu0 0
    %537 = vmatmul.mubr.bf16.gmra.mrb[0].mxu0 %v329
    %v538 = vpop.f32.mrb[0].mxu0
    %v539 = vadd.f32 %v105, %v538
    %v540 = vpop.f32.mrb[0].mxu0
    %v541 = vpop.f32.mrb[0].mxu0
    %v542 = vadd.f32 %v105, %v541
    %v543 = vpop.f32.mrb[0].mxu0
    %544 = vmatprep.mubr.bf16.mxu0 0
    %545 = vmatmul.mubr.bf16.gmra.mrb[0].mxu0 %v332
    %v546 = vpop.f32.mrb[0].mxu0
    %v547 = vadd.f32 %v105, %v546
    %v548 = vpop.f32.mrb[0].mxu0
    %v549 = vpop.f32.mrb[0].mxu0
    %v550 = vadd.f32 %v105, %v549
    %v551 = vpop.f32.mrb[0].mxu0
    %552 = vmatprep.mubr.bf16.mxu0 0
    %553 = vmatmul.mubr.bf16.gmra.mrb[0].mxu0 %v335
    %v554 = vpop.f32.mrb[0].mxu0
    %v555 = vadd.f32 %v105, %v554
    %v556 = vpop.f32.mrb[0].mxu0
    %v557 = vpop.f32.mrb[0].mxu0
    %v558 = vadd.f32 %v105, %v557
    %v559 = vpop.f32.mrb[0].mxu0
    %560 = vmatprep.mubr.bf16.mxu0 0
    %561 = vmatmul.mubr.bf16.gmra.mrb[0].mxu0 %v338
    %v562 = vpop.f32.mrb[0].mxu0
    %v563 = vadd.f32 %v105, %v562
    %v564 = vpop.f32.mrb[0].mxu0
    %v565 = vpop.f32.mrb[0].mxu0
    %v566 = vadd.f32 %v105, %v565
    %v567 = vpop.f32.mrb[0].mxu0
    %568 = vmatprep.mubr.bf16.mxu0 0
    %569 = vmatmul.mubr.bf16.gmra.mrb[0].mxu0 %v341
    %v570 = vpop.f32.mrb[0].mxu0
    %v571 = vadd.f32 %v105, %v570
    %v572 = vpop.f32.mrb[0].mxu0
    %v573 = vpop.f32.mrb[0].mxu0
    %v574 = vadd.f32 %v105, %v573
    %v575 = vpop.f32.mrb[0].mxu0
    %576 = vmatprep.mubr.bf16.mxu0 0
    %577 = vmatmul.mubr.bf16.gmra.mrb[0].mxu0 %v344
    %v578 = vpop.f32.mrb[0].mxu0
    %v579 = vadd.f32 %v105, %v578
    %v580 = vpop.f32.mrb[0].mxu0
    %v581 = vpop.f32.mrb[0].mxu0
    %v582 = vadd.f32 %v105, %v581
    %v583 = vpop.f32.mrb[0].mxu0
    %584 = vmatprep.mubr.bf16.mxu0 0
    %585 = vmatmul.mubr.bf16.gmra.mrb[0].mxu0 %v347
    %v586 = vpop.f32.mrb[0].mxu0
    %v587 = vadd.f32 %v105, %v586
    %v588 = vpop.f32.mrb[0].mxu0
    %v589 = vpop.f32.mrb[0].mxu0
    %v590 = vadd.f32 %v105, %v589
    %v591 = vpop.f32.mrb[0].mxu0
    %592 = vmatprep.mubr.bf16.mxu0 0
    %593 = vmatmul.mubr.bf16.gmra.mrb[0].mxu0 %v350
    %v594 = vpop.f32.mrb[0].mxu0
    %v595 = vadd.f32 %v105, %v594
    %v596 = vpop.f32.mrb[0].mxu0
    %v597 = vpop.f32.mrb[0].mxu0
    %v598 = vadd.f32 %v105, %v597
    %v599 = vpop.f32.mrb[0].mxu0
    %600 = vmatprep.mubr.bf16.mxu0 0
    %601 = vmatmul.mubr.bf16.gmra.mrb[0].mxu0 %v353
    %v602 = vpop.f32.mrb[0].mxu0
    %v603 = vadd.f32 %v105, %v602
    %v604 = vpop.f32.mrb[0].mxu0
    %v605 = vpop.f32.mrb[0].mxu0
    %v606 = vadd.f32 %v105, %v605
    %v607 = vpop.f32.mrb[0].mxu0
    %608 = vmatprep.mubr.bf16.mxu0 0
    %609 = vmatmul.mubr.bf16.gmra.mrb[0].mxu0 %v356
    %v610 = vpop.f32.mrb[0].mxu0
    %v611 = vadd.f32 %v105, %v610
    %v612 = vpop.f32.mrb[0].mxu0
    %v613 = vpop.f32.mrb[0].mxu0
    %v614 = vadd.f32 %v105, %v613
    %v615 = vpop.f32.mrb[0].mxu0
    %616 = vmatprep.mubr.bf16.mxu0 0
    %617 = vmatmul.mubr.bf16.gmra.mrb[0].mxu0 %v359
    %v618 = vpop.f32.mrb[0].mxu0
    %v619 = vadd.f32 %v105, %v618
    %v620 = vpop.f32.mrb[0].mxu0
    %v621 = vpop.f32.mrb[0].mxu0
    %v622 = vadd.f32 %v105, %v621
    %v623 = vpop.f32.mrb[0].mxu0
    %624 = vmatprep.mubr.bf16.mxu0 0
    %625 = vmatmul.mubr.bf16.gmra.mrb[0].mxu0 %v362
    %v626 = vpop.f32.mrb[0].mxu0
    %v627 = vadd.f32 %v105, %v626
    %v628 = vpop.f32.mrb[0].mxu0
    %v629 = vpop.f32.mrb[0].mxu0
    %v630 = vadd.f32 %v105, %v629
    %v631 = vpop.f32.mrb[0].mxu0
    %632 = vmatprep.mubr.bf16.mxu0 0
    %633 = vmatmul.mubr.bf16.gmra.mrb[0].mxu0 %v365
    %v634 = vpop.f32.mrb[0].mxu0
    %v635 = vadd.f32 %v105, %v634
    %v636 = vpop.f32.mrb[0].mxu0
    %v637 = vpop.f32.mrb[0].mxu0
    %v638 = vadd.f32 %v105, %v637
    %v639 = vpop.f32.mrb[0].mxu0
    %640 = vmatprep.mubr.bf16.mxu0 0
    %641 = vmatmul.mubr.bf16.gmra.mrb[0].mxu0 %v368
    %v642 = vpop.f32.mrb[0].mxu0
    %v643 = vadd.f32 %v105, %v642
    %v644 = vpop.f32.mrb[0].mxu0
    %v645 = vpop.f32.mrb[0].mxu0
    %v646 = vadd.f32 %v105, %v645
    %v647 = vpop.f32.mrb[0].mxu0
    %648 = vmatprep.mubr.bf16.mxu0 0
    %649 = vmatmul.mubr.bf16.gmra.mrb[0].mxu0 %v371
    %v650 = vpop.f32.mrb[0].mxu0
    %v651 = vadd.f32 %v105, %v650
    %v652 = vpop.f32.mrb[0].mxu0
    %v653 = vpop.f32.mrb[0].mxu0
    %v654 = vadd.f32 %v105, %v653
    %v655 = vpop.f32.mrb[0].mxu0
    %656 = vmatprep.mubr.bf16.mxu0 0
    %657 = vmatmul.mubr.bf16.gmra.mrb[0].mxu0 %v374
    %v658 = vpop.f32.mrb[0].mxu0
    %v659 = vadd.f32 %v105, %v658
    %v660 = vpop.f32.mrb[0].mxu0
    %v661 = vpop.f32.mrb[0].mxu0
    %v662 = vadd.f32 %v105, %v661
    %v663 = vpop.f32.mrb[0].mxu0
    %664 = vdwg.mxu0
    %v665 = vmax.f32 %v411, 0.0
    %v666 = vmax.f32 %v414, 0.0
    %v667 = vmax.f32 %v419, 0.0
    %v668 = vmax.f32 %v422, 0.0
    %v669 = vmax.f32 %v427, 0.0
    %v670 = vmax.f32 %v430, 0.0
    %v671 = vmax.f32 %v435, 0.0
    %v672 = vmax.f32 %v438, 0.0
    %v673 = vmax.f32 %v443, 0.0
    %v674 = vmax.f32 %v446, 0.0
    %v675 = vmax.f32 %v451, 0.0
    %v676 = vmax.f32 %v454, 0.0
    %v677 = vmax.f32 %v459, 0.0
    %v678 = vmax.f32 %v462, 0.0
    %v679 = vmax.f32 %v467, 0.0
    %v680 = vmax.f32 %v470, 0.0
    %v681 = vmax.f32 %v475, 0.0
    %v682 = vmax.f32 %v478, 0.0
    %v683 = vmax.f32 %v483, 0.0
    %v684 = vmax.f32 %v486, 0.0
    %v685 = vmax.f32 %v491, 0.0
    %v686 = vmax.f32 %v494, 0.0
    %v687 = vmax.f32 %v499, 0.0
    %v688 = vmax.f32 %v502, 0.0
    %v689 = vmax.f32 %v507, 0.0
    %v690 = vmax.f32 %v510, 0.0
    %v691 = vmax.f32 %v515, 0.0
    %v692 = vmax.f32 %v518, 0.0
    %v693 = vmax.f32 %v523, 0.0
    %v694 = vmax.f32 %v526, 0.0
    %v695 = vmax.f32 %v531, 0.0
    %v696 = vmax.f32 %v534, 0.0
    %v697 = vmax.f32 %v539, 0.0
    %v698 = vmax.f32 %v542, 0.0
    %v699 = vmax.f32 %v547, 0.0
    %v700 = vmax.f32 %v550, 0.0
    %v701 = vmax.f32 %v555, 0.0
    %v702 = vmax.f32 %v558, 0.0
    %v703 = vmax.f32 %v563, 0.0
    %v704 = vmax.f32 %v566, 0.0
    %v705 = vmax.f32 %v571, 0.0
    %v706 = vmax.f32 %v574, 0.0
    %v707 = vmax.f32 %v579, 0.0
    %v708 = vmax.f32 %v582, 0.0
    %v709 = vmax.f32 %v587, 0.0
    %v710 = vmax.f32 %v590, 0.0
    %v711 = vmax.f32 %v595, 0.0
    %v712 = vmax.f32 %v598, 0.0
    %v713 = vmax.f32 %v603, 0.0
    %v714 = vmax.f32 %v606, 0.0
    %v715 = vmax.f32 %v611, 0.0
    %v716 = vmax.f32 %v614, 0.0
    %v717 = vmax.f32 %v619, 0.0
    %v718 = vmax.f32 %v622, 0.0
    %v719 = vmax.f32 %v627, 0.0
    %v720 = vmax.f32 %v630, 0.0
    %v721 = vmax.f32 %v635, 0.0
    %v722 = vmax.f32 %v638, 0.0
    %v723 = vmax.f32 %v643, 0.0
    %v724 = vmax.f32 %v646, 0.0
    %v725 = vmax.f32 %v651, 0.0
    %v726 = vmax.f32 %v654, 0.0
    %v727 = vmax.f32 %v659, 0.0
    %v728 = vmax.f32 %v662, 0.0
    %v729 = vpack.c.bf16 %v666, %v665
    %v730 = vpack.c.bf16 %v668, %v667
    %v731 = vpack.c.bf16 %v670, %v669
    %v732 = vpack.c.bf16 %v672, %v671
    %v733 = vpack.c.bf16 %v674, %v673
    %v734 = vpack.c.bf16 %v676, %v675
    %v735 = vpack.c.bf16 %v678, %v677
    %v736 = vpack.c.bf16 %v680, %v679
    %v737 = vpack.c.bf16 %v682, %v681
    %v738 = vpack.c.bf16 %v684, %v683
    %v739 = vpack.c.bf16 %v686, %v685
    %v740 = vpack.c.bf16 %v688, %v687
    %v741 = vpack.c.bf16 %v690, %v689
    %v742 = vpack.c.bf16 %v692, %v691
    %v743 = vpack.c.bf16 %v694, %v693
    %v744 = vpack.c.bf16 %v696, %v695
    %v745 = vpack.c.bf16 %v698, %v697
    %v746 = vpack.c.bf16 %v700, %v699
    %v747 = vpack.c.bf16 %v702, %v701
    %v748 = vpack.c.bf16 %v704, %v703
    %v749 = vpack.c.bf16 %v706, %v705
    %v750 = vpack.c.bf16 %v708, %v707
    %v751 = vpack.c.bf16 %v710, %v709
    %v752 = vpack.c.bf16 %v712, %v711
    %v753 = vpack.c.bf16 %v714, %v713
    %v754 = vpack.c.bf16 %v716, %v715
    %v755 = vpack.c.bf16 %v718, %v717
    %v756 = vpack.c.bf16 %v720, %v719
    %v757 = vpack.c.bf16 %v722, %v721
    %v758 = vpack.c.bf16 %v724, %v723
    %v759 = vpack.c.bf16 %v726, %v725
    %v760 = vpack.c.bf16 %v728, %v727
    %v761 = vld [vmem:[%s3] sm:$0xf]
    %v762 = vld [vmem:[%s3 + $0x4] sm:$0xf]
    %v763 = vld [vmem:[%s3 + $0x8] sm:$0xf]
    %v764 = vld [vmem:[%s3 + $0xc] sm:$0xf]
    %v765 = vld [vmem:[%s4] sm:$0x1]
    %v767 = vlaneseq
    %v768 = vshrl.u32 %v767, 7
    %v769 = vsub.s32 0, %v768
    %v770 = vrot.slane %v765, %v769
    %v776 = vunpack.c.l.b16 %v761
    %v777 = vunpack.c.l.b16 %v762
    %v778 = vunpack.c.l.b16 %v763
    %v779 = vunpack.c.l.b16 %v764
    %v780 = vpack.c.b16 %v777, %v776
    %v781 = vpack.c.b16 %v779, %v778
    %v785 = vsel %vm279, %v729, 0
    %v788 = vsel %vm279, %v730, 0
    %v791 = vsel %vm279, %v731, 0
    %v794 = vsel %vm279, %v732, 0
    %v797 = vsel %vm279, %v733, 0
    %v800 = vsel %vm279, %v734, 0
    %v803 = vsel %vm279, %v735, 0
    %v806 = vsel %vm279, %v736, 0
    %v809 = vsel %vm279, %v737, 0
    %v812 = vsel %vm279, %v738, 0
    %v815 = vsel %vm279, %v739, 0
    %v818 = vsel %vm279, %v740, 0
    %v821 = vsel %vm279, %v741, 0
    %v824 = vsel %vm279, %v742, 0
    %v827 = vsel %vm279, %v743, 0
    %v830 = vsel %vm279, %v744, 0
    %v833 = vsel %vm279, %v745, 0
    %v836 = vsel %vm279, %v746, 0
    %v839 = vsel %vm279, %v747, 0
    %v842 = vsel %vm279, %v748, 0
    %v845 = vsel %vm279, %v749, 0
    %v848 = vsel %vm279, %v750, 0
    %v851 = vsel %vm279, %v751, 0
    %v854 = vsel %vm279, %v752, 0
    %v857 = vsel %vm279, %v753, 0
    %v860 = vsel %vm279, %v754, 0
    %v863 = vsel %vm279, %v755, 0
    %v866 = vsel %vm279, %v756, 0
    %v869 = vsel %vm279, %v757, 0
    %v872 = vsel %vm279, %v758, 0
    %v875 = vsel %vm279, %v759, 0
    %v878 = vsel %vm279, %v760, 0
    %880 = vmatprep.subr.bf16.mxu0 0
    %881 = vmatpush1.bf16.msra.mxu0 %v780
    %882 = vmatprep.subr.bf16.mxu0 0
    %883 = vmatpush1.bf16.msra.mxu0 %v781
    %884 = vmatprep.subr.bf16.mxu0 0
    %885 = vmatpush1.bf16.msra.mxu0 0
    %886 = vmatprep.subr.bf16.mxu0 0
    %887 = vmatpush1.bf16.msra.mxu0 0
    %888 = vmatprep.subr.bf16.mxu0 0
    %889 = vmatpush1.bf16.msra.mxu0 0
    %890 = vmatprep.subr.bf16.mxu0 0
    %891 = vmatpush1.bf16.msra.mxu0 0
    %892 = vmatprep.subr.bf16.mxu0 0
    %893 = vmatpush1.bf16.msra.mxu0 0
    %894 = vmatprep.subr.bf16.mxu0 0
    %895 = vmatpush1.bf16.msra.mxu0 0
    %896 = vmatprep.subr.bf16.mxu0 0
    %897 = vmatpush1.bf16.msra.mxu0 0
    %898 = vmatprep.subr.bf16.mxu0 0
    %899 = vmatpush1.bf16.msra.mxu0 0
    %900 = vmatprep.subr.bf16.mxu0 0
    %901 = vmatpush1.bf16.msra.mxu0 0
    %902 = vmatprep.subr.bf16.mxu0 0
    %903 = vmatpush1.bf16.msra.mxu0 0
    %904 = vmatprep.subr.bf16.mxu0 0
    %905 = vmatpush1.bf16.msra.mxu0 0
    %906 = vmatprep.subr.bf16.mxu0 0
    %907 = vmatpush1.bf16.msra.mxu0 0
    %908 = vmatprep.subr.bf16.mxu0 0
    %909 = vmatpush1.bf16.msra.mxu0 0
    %910 = vmatprep.subr.bf16.mxu0 0
    %911 = vmatpush1.bf16.msra.mxu0 0
    %912 = vmatprep.mubr.bf16.mxu0 0
    %913 = vmatmul.mubr.bf16.gmra.mrb[0].mxu0 %v785
    %v914 = vpop.f32.mrb[0].mxu0
    %v915 = vadd.f32 %v770, %v914
    %v916 = vpop.f32.mrb[0].mxu0
    %v917 = vpop.f32.mrb[0].mxu0
    %v918 = vadd.f32 %v770, %v917
    %v919 = vpop.f32.mrb[0].mxu0
    %920 = vmatprep.mubr.bf16.mxu0 0
    %921 = vmatmul.mubr.bf16.gmra.mrb[0].mxu0 %v788
    %v922 = vpop.f32.mrb[0].mxu0
    %v923 = vadd.f32 %v770, %v922
    %v924 = vpop.f32.mrb[0].mxu0
    %v925 = vpop.f32.mrb[0].mxu0
    %v926 = vadd.f32 %v770, %v925
    %v927 = vpop.f32.mrb[0].mxu0
    %928 = vmatprep.mubr.bf16.mxu0 0
    %929 = vmatmul.mubr.bf16.gmra.mrb[0].mxu0 %v791
    %v930 = vpop.f32.mrb[0].mxu0
    %v931 = vadd.f32 %v770, %v930
    %v932 = vpop.f32.mrb[0].mxu0
    %v933 = vpop.f32.mrb[0].mxu0
    %v934 = vadd.f32 %v770, %v933
    %v935 = vpop.f32.mrb[0].mxu0
    %936 = vmatprep.mubr.bf16.mxu0 0
    %937 = vmatmul.mubr.bf16.gmra.mrb[0].mxu0 %v794
    %v938 = vpop.f32.mrb[0].mxu0
    %v939 = vadd.f32 %v770, %v938
    %v940 = vpop.f32.mrb[0].mxu0
    %v941 = vpop.f32.mrb[0].mxu0
    %v942 = vadd.f32 %v770, %v941
    %v943 = vpop.f32.mrb[0].mxu0
    %944 = vmatprep.mubr.bf16.mxu0 0
    %945 = vmatmul.mubr.bf16.gmra.mrb[0].mxu0 %v797
    %v946 = vpop.f32.mrb[0].mxu0
    %v947 = vadd.f32 %v770, %v946
    %v948 = vpop.f32.mrb[0].mxu0
    %v949 = vpop.f32.mrb[0].mxu0
    %v950 = vadd.f32 %v770, %v949
    %v951 = vpop.f32.mrb[0].mxu0
    %952 = vmatprep.mubr.bf16.mxu0 0
    %953 = vmatmul.mubr.bf16.gmra.mrb[0].mxu0 %v800
    %v954 = vpop.f32.mrb[0].mxu0
    %v955 = vadd.f32 %v770, %v954
    %v956 = vpop.f32.mrb[0].mxu0
    %v957 = vpop.f32.mrb[0].mxu0
    %v958 = vadd.f32 %v770, %v957
    %v959 = vpop.f32.mrb[0].mxu0
    %960 = vmatprep.mubr.bf16.mxu0 0
    %961 = vmatmul.mubr.bf16.gmra.mrb[0].mxu0 %v803
    %v962 = vpop.f32.mrb[0].mxu0
    %v963 = vadd.f32 %v770, %v962
    %v964 = vpop.f32.mrb[0].mxu0
    %v965 = vpop.f32.mrb[0].mxu0
    %v966 = vadd.f32 %v770, %v965
    %v967 = vpop.f32.mrb[0].mxu0
    %968 = vmatprep.mubr.bf16.mxu0 0
    %969 = vmatmul.mubr.bf16.gmra.mrb[0].mxu0 %v806
    %v970 = vpop.f32.mrb[0].mxu0
    %v971 = vadd.f32 %v770, %v970
    %v972 = vpop.f32.mrb[0].mxu0
    %v973 = vpop.f32.mrb[0].mxu0
    %v974 = vadd.f32 %v770, %v973
    %v975 = vpop.f32.mrb[0].mxu0
    %976 = vmatprep.mubr.bf16.mxu0 0
    %977 = vmatmul.mubr.bf16.gmra.mrb[0].mxu0 %v809
    %v978 = vpop.f32.mrb[0].mxu0
    %v979 = vadd.f32 %v770, %v978
    %v980 = vpop.f32.mrb[0].mxu0
    %v981 = vpop.f32.mrb[0].mxu0
    %v982 = vadd.f32 %v770, %v981
    %v983 = vpop.f32.mrb[0].mxu0
    %984 = vmatprep.mubr.bf16.mxu0 0
    %985 = vmatmul.mubr.bf16.gmra.mrb[0].mxu0 %v812
    %v986 = vpop.f32.mrb[0].mxu0
    %v987 = vadd.f32 %v770, %v986
    %v988 = vpop.f32.mrb[0].mxu0
    %v989 = vpop.f32.mrb[0].mxu0
    %v990 = vadd.f32 %v770, %v989
    %v991 = vpop.f32.mrb[0].mxu0
    %992 = vmatprep.mubr.bf16.mxu0 0
    %993 = vmatmul.mubr.bf16.gmra.mrb[0].mxu0 %v815
    %v994 = vpop.f32.mrb[0].mxu0
    %v995 = vadd.f32 %v770, %v994
    %v996 = vpop.f32.mrb[0].mxu0
    %v997 = vpop.f32.mrb[0].mxu0
    %v998 = vadd.f32 %v770, %v997
    %v999 = vpop.f32.mrb[0].mxu0
    %1000 = vmatprep.mubr.bf16.mxu0 0
    %1001 = vmatmul.mubr.bf16.gmra.mrb[0].mxu0 %v818
    %v1002 = vpop.f32.mrb[0].mxu0
    %v1003 = vadd.f32 %v770, %v1002
    %v1004 = vpop.f32.mrb[0].mxu0
    %v1005 = vpop.f32.mrb[0].mxu0
    %v1006 = vadd.f32 %v770, %v1005
    %v1007 = vpop.f32.mrb[0].mxu0
    %1008 = vmatprep.mubr.bf16.mxu0 0
    %1009 = vmatmul.mubr.bf16.gmra.mrb[0].mxu0 %v821
    %v1010 = vpop.f32.mrb[0].mxu0
    %v1011 = vadd.f32 %v770, %v1010
    %v1012 = vpop.f32.mrb[0].mxu0
    %v1013 = vpop.f32.mrb[0].mxu0
    %v1014 = vadd.f32 %v770, %v1013
    %v1015 = vpop.f32.mrb[0].mxu0
    %1016 = vmatprep.mubr.bf16.mxu0 0
    %1017 = vmatmul.mubr.bf16.gmra.mrb[0].mxu0 %v824
    %v1018 = vpop.f32.mrb[0].mxu0
    %v1019 = vadd.f32 %v770, %v1018
    %v1020 = vpop.f32.mrb[0].mxu0
    %v1021 = vpop.f32.mrb[0].mxu0
    %v1022 = vadd.f32 %v770, %v1021
    %v1023 = vpop.f32.mrb[0].mxu0
    %1024 = vmatprep.mubr.bf16.mxu0 0
    %1025 = vmatmul.mubr.bf16.gmra.mrb[0].mxu0 %v827
    %v1026 = vpop.f32.mrb[0].mxu0
    %v1027 = vadd.f32 %v770, %v1026
    %v1028 = vpop.f32.mrb[0].mxu0
    %v1029 = vpop.f32.mrb[0].mxu0
    %v1030 = vadd.f32 %v770, %v1029
    %v1031 = vpop.f32.mrb[0].mxu0
    %1032 = vmatprep.mubr.bf16.mxu0 0
    %1033 = vmatmul.mubr.bf16.gmra.mrb[0].mxu0 %v830
    %v1034 = vpop.f32.mrb[0].mxu0
    %v1035 = vadd.f32 %v770, %v1034
    %v1036 = vpop.f32.mrb[0].mxu0
    %v1037 = vpop.f32.mrb[0].mxu0
    %v1038 = vadd.f32 %v770, %v1037
    %v1039 = vpop.f32.mrb[0].mxu0
    %1040 = vmatprep.mubr.bf16.mxu0 0
    %1041 = vmatmul.mubr.bf16.gmra.mrb[0].mxu0 %v833
    %v1042 = vpop.f32.mrb[0].mxu0
    %v1043 = vadd.f32 %v770, %v1042
    %v1044 = vpop.f32.mrb[0].mxu0
    %v1045 = vpop.f32.mrb[0].mxu0
    %v1046 = vadd.f32 %v770, %v1045
    %v1047 = vpop.f32.mrb[0].mxu0
    %1048 = vmatprep.mubr.bf16.mxu0 0
    %1049 = vmatmul.mubr.bf16.gmra.mrb[0].mxu0 %v836
    %v1050 = vpop.f32.mrb[0].mxu0
    %v1051 = vadd.f32 %v770, %v1050
    %v1052 = vpop.f32.mrb[0].mxu0
    %v1053 = vpop.f32.mrb[0].mxu0
    %v1054 = vadd.f32 %v770, %v1053
    %v1055 = vpop.f32.mrb[0].mxu0
    %1056 = vmatprep.mubr.bf16.mxu0 0
    %1057 = vmatmul.mubr.bf16.gmra.mrb[0].mxu0 %v839
    %v1058 = vpop.f32.mrb[0].mxu0
    %v1059 = vadd.f32 %v770, %v1058
    %v1060 = vpop.f32.mrb[0].mxu0
    %v1061 = vpop.f32.mrb[0].mxu0
    %v1062 = vadd.f32 %v770, %v1061
    %v1063 = vpop.f32.mrb[0].mxu0
    %1064 = vmatprep.mubr.bf16.mxu0 0
    %1065 = vmatmul.mubr.bf16.gmra.mrb[0].mxu0 %v842
    %v1066 = vpop.f32.mrb[0].mxu0
    %v1067 = vadd.f32 %v770, %v1066
    %v1068 = vpop.f32.mrb[0].mxu0
    %v1069 = vpop.f32.mrb[0].mxu0
    %v1070 = vadd.f32 %v770, %v1069
    %v1071 = vpop.f32.mrb[0].mxu0
    %1072 = vmatprep.mubr.bf16.mxu0 0
    %1073 = vmatmul.mubr.bf16.gmra.mrb[0].mxu0 %v845
    %v1074 = vpop.f32.mrb[0].mxu0
    %v1075 = vadd.f32 %v770, %v1074
    %v1076 = vpop.f32.mrb[0].mxu0
    %v1077 = vpop.f32.mrb[0].mxu0
    %v1078 = vadd.f32 %v770, %v1077
    %v1079 = vpop.f32.mrb[0].mxu0
    %1080 = vmatprep.mubr.bf16.mxu0 0
    %1081 = vmatmul.mubr.bf16.gmra.mrb[0].mxu0 %v848
    %v1082 = vpop.f32.mrb[0].mxu0
    %v1083 = vadd.f32 %v770, %v1082
    %v1084 = vpop.f32.mrb[0].mxu0
    %v1085 = vpop.f32.mrb[0].mxu0
    %v1086 = vadd.f32 %v770, %v1085
    %v1087 = vpop.f32.mrb[0].mxu0
    %1088 = vmatprep.mubr.bf16.mxu0 0
    %1089 = vmatmul.mubr.bf16.gmra.mrb[0].mxu0 %v851
    %v1090 = vpop.f32.mrb[0].mxu0
    %v1091 = vadd.f32 %v770, %v1090
    %v1092 = vpop.f32.mrb[0].mxu0
    %v1093 = vpop.f32.mrb[0].mxu0
    %v1094 = vadd.f32 %v770, %v1093
    %v1095 = vpop.f32.mrb[0].mxu0
    %1096 = vmatprep.mubr.bf16.mxu0 0
    %1097 = vmatmul.mubr.bf16.gmra.mrb[0].mxu0 %v854
    %v1098 = vpop.f32.mrb[0].mxu0
    %v1099 = vadd.f32 %v770, %v1098
    %v1100 = vpop.f32.mrb[0].mxu0
    %v1101 = vpop.f32.mrb[0].mxu0
    %v1102 = vadd.f32 %v770, %v1101
    %v1103 = vpop.f32.mrb[0].mxu0
    %1104 = vmatprep.mubr.bf16.mxu0 0
    %1105 = vmatmul.mubr.bf16.gmra.mrb[0].mxu0 %v857
    %v1106 = vpop.f32.mrb[0].mxu0
    %v1107 = vadd.f32 %v770, %v1106
    %v1108 = vpop.f32.mrb[0].mxu0
    %v1109 = vpop.f32.mrb[0].mxu0
    %v1110 = vadd.f32 %v770, %v1109
    %v1111 = vpop.f32.mrb[0].mxu0
    %1112 = vmatprep.mubr.bf16.mxu0 0
    %1113 = vmatmul.mubr.bf16.gmra.mrb[0].mxu0 %v860
    %v1114 = vpop.f32.mrb[0].mxu0
    %v1115 = vadd.f32 %v770, %v1114
    %v1116 = vpop.f32.mrb[0].mxu0
    %v1117 = vpop.f32.mrb[0].mxu0
    %v1118 = vadd.f32 %v770, %v1117
    %v1119 = vpop.f32.mrb[0].mxu0
    %1120 = vmatprep.mubr.bf16.mxu0 0
    %1121 = vmatmul.mubr.bf16.gmra.mrb[0].mxu0 %v863
    %v1122 = vpop.f32.mrb[0].mxu0
    %v1123 = vadd.f32 %v770, %v1122
    %v1124 = vpop.f32.mrb[0].mxu0
    %v1125 = vpop.f32.mrb[0].mxu0
    %v1126 = vadd.f32 %v770, %v1125
    %v1127 = vpop.f32.mrb[0].mxu0
    %1128 = vmatprep.mubr.bf16.mxu0 0
    %1129 = vmatmul.mubr.bf16.gmra.mrb[0].mxu0 %v866
    %v1130 = vpop.f32.mrb[0].mxu0
    %v1131 = vadd.f32 %v770, %v1130
    %v1132 = vpop.f32.mrb[0].mxu0
    %v1133 = vpop.f32.mrb[0].mxu0
    %v1134 = vadd.f32 %v770, %v1133
    %v1135 = vpop.f32.mrb[0].mxu0
    %1136 = vmatprep.mubr.bf16.mxu0 0
    %1137 = vmatmul.mubr.bf16.gmra.mrb[0].mxu0 %v869
    %v1138 = vpop.f32.mrb[0].mxu0
    %v1139 = vadd.f32 %v770, %v1138
    %v1140 = vpop.f32.mrb[0].mxu0
    %v1141 = vpop.f32.mrb[0].mxu0
    %v1142 = vadd.f32 %v770, %v1141
    %v1143 = vpop.f32.mrb[0].mxu0
    %1144 = vmatprep.mubr.bf16.mxu0 0
    %1145 = vmatmul.mubr.bf16.gmra.mrb[0].mxu0 %v872
    %v1146 = vpop.f32.mrb[0].mxu0
    %v1147 = vadd.f32 %v770, %v1146
    %v1148 = vpop.f32.mrb[0].mxu0
    %v1149 = vpop.f32.mrb[0].mxu0
    %v1150 = vadd.f32 %v770, %v1149
    %v1151 = vpop.f32.mrb[0].mxu0
    %1152 = vmatprep.mubr.bf16.mxu0 0
    %1153 = vmatmul.mubr.bf16.gmra.mrb[0].mxu0 %v875
    %v1154 = vpop.f32.mrb[0].mxu0
    %v1155 = vadd.f32 %v770, %v1154
    %v1156 = vpop.f32.mrb[0].mxu0
    %v1157 = vpop.f32.mrb[0].mxu0
    %v1158 = vadd.f32 %v770, %v1157
    %v1159 = vpop.f32.mrb[0].mxu0
    %1160 = vmatprep.mubr.bf16.mxu0 0
    %1161 = vmatmul.mubr.bf16.gmra.mrb[0].mxu0 %v878
    %v1162 = vpop.f32.mrb[0].mxu0
    %v1163 = vadd.f32 %v770, %v1162
    %v1164 = vpop.f32.mrb[0].mxu0
    %v1165 = vpop.f32.mrb[0].mxu0
    %v1166 = vadd.f32 %v770, %v1165
    %v1167 = vpop.f32.mrb[0].mxu0
    %1168 = vdwg.mxu0
    %vm1169 = vcmask 523264
    %1170 = vst.msk [vmem:[%s7] sm:$0xff] %vm1169, %v915
    %1171 = vst.msk [vmem:[%s7 + $0x8] sm:$0xff] %vm1169, %v918
    %1172 = vst.msk [vmem:[%s7 + $0x10] sm:$0xff] %vm1169, %v923
    %1173 = vst.msk [vmem:[%s7 + $0x18] sm:$0xff] %vm1169, %v926
    %1174 = vst.msk [vmem:[%s7 + $0x20] sm:$0xff] %vm1169, %v931
    %1175 = vst.msk [vmem:[%s7 + $0x28] sm:$0xff] %vm1169, %v934
    %1176 = vst.msk [vmem:[%s7 + $0x30] sm:$0xff] %vm1169, %v939
    %1177 = vst.msk [vmem:[%s7 + $0x38] sm:$0xff] %vm1169, %v942
    %1178 = vst.msk [vmem:[%s7 + $0x40] sm:$0xff] %vm1169, %v947
    %1179 = vst.msk [vmem:[%s7 + $0x48] sm:$0xff] %vm1169, %v950
    %1180 = vst.msk [vmem:[%s7 + $0x50] sm:$0xff] %vm1169, %v955
    %1181 = vst.msk [vmem:[%s7 + $0x58] sm:$0xff] %vm1169, %v958
    %1182 = vst.msk [vmem:[%s7 + $0x60] sm:$0xff] %vm1169, %v963
    %1183 = vst.msk [vmem:[%s7 + $0x68] sm:$0xff] %vm1169, %v966
    %1184 = vst.msk [vmem:[%s7 + $0x70] sm:$0xff] %vm1169, %v971
    %1185 = vst.msk [vmem:[%s7 + $0x78] sm:$0xff] %vm1169, %v974
    %1186 = vst.msk [vmem:[%s7 + $0x80] sm:$0xff] %vm1169, %v979
    %1187 = vst.msk [vmem:[%s7 + $0x88] sm:$0xff] %vm1169, %v982
    %1188 = vst.msk [vmem:[%s7 + $0x90] sm:$0xff] %vm1169, %v987
    %1189 = vst.msk [vmem:[%s7 + $0x98] sm:$0xff] %vm1169, %v990
    %1190 = vst.msk [vmem:[%s7 + $0xa0] sm:$0xff] %vm1169, %v995
    %1191 = vst.msk [vmem:[%s7 + $0xa8] sm:$0xff] %vm1169, %v998
    %1192 = vst.msk [vmem:[%s7 + $0xb0] sm:$0xff] %vm1169, %v1003
    %1193 = vst.msk [vmem:[%s7 + $0xb8] sm:$0xff] %vm1169, %v1006
    %1194 = vst.msk [vmem:[%s7 + $0xc0] sm:$0xff] %vm1169, %v1011
    %1195 = vst.msk [vmem:[%s7 + $0xc8] sm:$0xff] %vm1169, %v1014
    %1196 = vst.msk [vmem:[%s7 + $0xd0] sm:$0xff] %vm1169, %v1019
    %1197 = vst.msk [vmem:[%s7 + $0xd8] sm:$0xff] %vm1169, %v1022
    %1198 = vst.msk [vmem:[%s7 + $0xe0] sm:$0xff] %vm1169, %v1027
    %1199 = vst.msk [vmem:[%s7 + $0xe8] sm:$0xff] %vm1169, %v1030
    %1200 = vst.msk [vmem:[%s7 + $0xf0] sm:$0xff] %vm1169, %v1035
    %1201 = vst.msk [vmem:[%s7 + $0xf8] sm:$0xff] %vm1169, %v1038
    %1202 = vst.msk [vmem:[%s7 + $0x100] sm:$0xff] %vm1169, %v1043
    %1203 = vst.msk [vmem:[%s7 + $0x108] sm:$0xff] %vm1169, %v1046
    %1204 = vst.msk [vmem:[%s7 + $0x110] sm:$0xff] %vm1169, %v1051
    %1205 = vst.msk [vmem:[%s7 + $0x118] sm:$0xff] %vm1169, %v1054
    %1206 = vst.msk [vmem:[%s7 + $0x120] sm:$0xff] %vm1169, %v1059
    %1207 = vst.msk [vmem:[%s7 + $0x128] sm:$0xff] %vm1169, %v1062
    %1208 = vst.msk [vmem:[%s7 + $0x130] sm:$0xff] %vm1169, %v1067
    %1209 = vst.msk [vmem:[%s7 + $0x138] sm:$0xff] %vm1169, %v1070
    %1210 = vst.msk [vmem:[%s7 + $0x140] sm:$0xff] %vm1169, %v1075
    %1211 = vst.msk [vmem:[%s7 + $0x148] sm:$0xff] %vm1169, %v1078
    %1212 = vst.msk [vmem:[%s7 + $0x150] sm:$0xff] %vm1169, %v1083
    %1213 = vst.msk [vmem:[%s7 + $0x158] sm:$0xff] %vm1169, %v1086
    %1214 = vst.msk [vmem:[%s7 + $0x160] sm:$0xff] %vm1169, %v1091
    %1215 = vst.msk [vmem:[%s7 + $0x168] sm:$0xff] %vm1169, %v1094
    %1216 = vst.msk [vmem:[%s7 + $0x170] sm:$0xff] %vm1169, %v1099
    %1217 = vst.msk [vmem:[%s7 + $0x178] sm:$0xff] %vm1169, %v1102
    %1218 = vst.msk [vmem:[%s7 + $0x180] sm:$0xff] %vm1169, %v1107
    %1219 = vst.msk [vmem:[%s7 + $0x188] sm:$0xff] %vm1169, %v1110
    %1220 = vst.msk [vmem:[%s7 + $0x190] sm:$0xff] %vm1169, %v1115
    %1221 = vst.msk [vmem:[%s7 + $0x198] sm:$0xff] %vm1169, %v1118
    %1222 = vst.msk [vmem:[%s7 + $0x1a0] sm:$0xff] %vm1169, %v1123
    %1223 = vst.msk [vmem:[%s7 + $0x1a8] sm:$0xff] %vm1169, %v1126
    %1224 = vst.msk [vmem:[%s7 + $0x1b0] sm:$0xff] %vm1169, %v1131
    %1225 = vst.msk [vmem:[%s7 + $0x1b8] sm:$0xff] %vm1169, %v1134
    %1226 = vst.msk [vmem:[%s7 + $0x1c0] sm:$0xff] %vm1169, %v1139
    %1227 = vst.msk [vmem:[%s7 + $0x1c8] sm:$0xff] %vm1169, %v1142
    %1228 = vst.msk [vmem:[%s7 + $0x1d0] sm:$0xff] %vm1169, %v1147
    %1229 = vst.msk [vmem:[%s7 + $0x1d8] sm:$0xff] %vm1169, %v1150
    %1230 = vst.msk [vmem:[%s7 + $0x1e0] sm:$0xff] %vm1169, %v1155
    %1231 = vst.msk [vmem:[%s7 + $0x1e8] sm:$0xff] %vm1169, %v1158
    %1232 = vst.msk [vmem:[%s7 + $0x1f0] sm:$0xff] %vm1169, %v1163
    %1233 = vst.msk [vmem:[%s7 + $0x1f8] sm:$0xff] %vm1169, %v1166
    %v1234 = vsel %vm279, %v665, 0.0
    %v1235 = vsel %vm279, %v666, 0.0
    %v1236 = vadd.f32 %v1234, %v1235
    %v1237 = vsel %vm279, %v667, 0.0
    %v1238 = vadd.f32 %v1236, %v1237
    %v1239 = vsel %vm279, %v668, 0.0
    %v1240 = vadd.f32 %v1238, %v1239
    %v1241 = vsel %vm279, %v669, 0.0
    %v1242 = vadd.f32 %v1240, %v1241
    %v1243 = vsel %vm279, %v670, 0.0
    %v1244 = vadd.f32 %v1242, %v1243
    %v1245 = vsel %vm279, %v671, 0.0
    %v1246 = vadd.f32 %v1244, %v1245
    %v1247 = vsel %vm279, %v672, 0.0
    %v1248 = vadd.f32 %v1246, %v1247
    %v1249 = vsel %vm279, %v673, 0.0
    %v1250 = vadd.f32 %v1248, %v1249
    %v1251 = vsel %vm279, %v674, 0.0
    %v1252 = vadd.f32 %v1250, %v1251
    %v1253 = vsel %vm279, %v675, 0.0
    %v1254 = vadd.f32 %v1252, %v1253
    %v1255 = vsel %vm279, %v676, 0.0
    %v1256 = vadd.f32 %v1254, %v1255
    %v1257 = vsel %vm279, %v677, 0.0
    %v1258 = vadd.f32 %v1256, %v1257
    %v1259 = vsel %vm279, %v678, 0.0
    %v1260 = vadd.f32 %v1258, %v1259
    %v1261 = vsel %vm279, %v679, 0.0
    %v1262 = vadd.f32 %v1260, %v1261
    %v1263 = vsel %vm279, %v680, 0.0
    %v1264 = vadd.f32 %v1262, %v1263
    %v1265 = vsel %vm279, %v681, 0.0
    %v1266 = vadd.f32 %v1264, %v1265
    %v1267 = vsel %vm279, %v682, 0.0
    %v1268 = vadd.f32 %v1266, %v1267
    %v1269 = vsel %vm279, %v683, 0.0
    %v1270 = vadd.f32 %v1268, %v1269
    %v1271 = vsel %vm279, %v684, 0.0
    %v1272 = vadd.f32 %v1270, %v1271
    %v1273 = vsel %vm279, %v685, 0.0
    %v1274 = vadd.f32 %v1272, %v1273
    %v1275 = vsel %vm279, %v686, 0.0
    %v1276 = vadd.f32 %v1274, %v1275
    %v1277 = vsel %vm279, %v687, 0.0
    %v1278 = vadd.f32 %v1276, %v1277
    %v1279 = vsel %vm279, %v688, 0.0
    %v1280 = vadd.f32 %v1278, %v1279
    %v1281 = vsel %vm279, %v689, 0.0
    %v1282 = vadd.f32 %v1280, %v1281
    %v1283 = vsel %vm279, %v690, 0.0
    %v1284 = vadd.f32 %v1282, %v1283
    %v1285 = vsel %vm279, %v691, 0.0
    %v1286 = vadd.f32 %v1284, %v1285
    %v1287 = vsel %vm279, %v692, 0.0
    %v1288 = vadd.f32 %v1286, %v1287
    %v1289 = vsel %vm279, %v693, 0.0
    %v1290 = vadd.f32 %v1288, %v1289
    %v1291 = vsel %vm279, %v694, 0.0
    %v1292 = vadd.f32 %v1290, %v1291
    %v1293 = vsel %vm279, %v695, 0.0
    %v1294 = vadd.f32 %v1292, %v1293
    %v1295 = vsel %vm279, %v696, 0.0
    %v1296 = vadd.f32 %v1294, %v1295
    %v1297 = vrot.slane %v1296, 4
    %v1298 = vadd.f32 %v1296, %v1297
    %v1299 = vrot.slane %v1298, 2
    %v1300 = vadd.f32 %v1298, %v1299
    %v1301 = vrot.slane %v1300, 1
    %v1302 = vadd.f32 %v1300, %v1301
    %v1303 = vsel %vm279, %v697, 0.0
    %v1304 = vsel %vm279, %v698, 0.0
    %v1305 = vadd.f32 %v1303, %v1304
    %v1306 = vsel %vm279, %v699, 0.0
    %v1307 = vadd.f32 %v1305, %v1306
    %v1308 = vsel %vm279, %v700, 0.0
    %v1309 = vadd.f32 %v1307, %v1308
    %v1310 = vsel %vm279, %v701, 0.0
    %v1311 = vadd.f32 %v1309, %v1310
    %v1312 = vsel %vm279, %v702, 0.0
    %v1313 = vadd.f32 %v1311, %v1312
    %v1314 = vsel %vm279, %v703, 0.0
    %v1315 = vadd.f32 %v1313, %v1314
    %v1316 = vsel %vm279, %v704, 0.0
    %v1317 = vadd.f32 %v1315, %v1316
    %v1318 = vsel %vm279, %v705, 0.0
    %v1319 = vadd.f32 %v1317, %v1318
    %v1320 = vsel %vm279, %v706, 0.0
    %v1321 = vadd.f32 %v1319, %v1320
    %v1322 = vsel %vm279, %v707, 0.0
    %v1323 = vadd.f32 %v1321, %v1322
    %v1324 = vsel %vm279, %v708, 0.0
    %v1325 = vadd.f32 %v1323, %v1324
    %v1326 = vsel %vm279, %v709, 0.0
    %v1327 = vadd.f32 %v1325, %v1326
    %v1328 = vsel %vm279, %v710, 0.0
    %v1329 = vadd.f32 %v1327, %v1328
    %v1330 = vsel %vm279, %v711, 0.0
    %v1331 = vadd.f32 %v1329, %v1330
    %v1332 = vsel %vm279, %v712, 0.0
    %v1333 = vadd.f32 %v1331, %v1332
    %v1334 = vsel %vm279, %v713, 0.0
    %v1335 = vadd.f32 %v1333, %v1334
    %v1336 = vsel %vm279, %v714, 0.0
    %v1337 = vadd.f32 %v1335, %v1336
    %v1338 = vsel %vm279, %v715, 0.0
    %v1339 = vadd.f32 %v1337, %v1338
    %v1340 = vsel %vm279, %v716, 0.0
    %v1341 = vadd.f32 %v1339, %v1340
    %v1342 = vsel %vm279, %v717, 0.0
    %v1343 = vadd.f32 %v1341, %v1342
    %v1344 = vsel %vm279, %v718, 0.0
    %v1345 = vadd.f32 %v1343, %v1344
    %v1346 = vsel %vm279, %v719, 0.0
    %v1347 = vadd.f32 %v1345, %v1346
    %v1348 = vsel %vm279, %v720, 0.0
    %v1349 = vadd.f32 %v1347, %v1348
    %v1350 = vsel %vm279, %v721, 0.0
    %v1351 = vadd.f32 %v1349, %v1350
    %v1352 = vsel %vm279, %v722, 0.0
    %v1353 = vadd.f32 %v1351, %v1352
    %v1354 = vsel %vm279, %v723, 0.0
    %v1355 = vadd.f32 %v1353, %v1354
    %v1356 = vsel %vm279, %v724, 0.0
    %v1357 = vadd.f32 %v1355, %v1356
    %v1358 = vsel %vm279, %v725, 0.0
    %v1359 = vadd.f32 %v1357, %v1358
    %v1360 = vsel %vm279, %v726, 0.0
    %v1361 = vadd.f32 %v1359, %v1360
    %v1362 = vsel %vm279, %v727, 0.0
    %v1363 = vadd.f32 %v1361, %v1362
    %v1364 = vsel %vm279, %v728, 0.0
    %v1365 = vadd.f32 %v1363, %v1364
    %v1366 = vrot.slane %v1365, 4
    %v1367 = vadd.f32 %v1365, %v1366
    %v1368 = vrot.slane %v1367, 2
    %v1369 = vadd.f32 %v1367, %v1368
    %v1370 = vrot.slane %v1369, 1
    %v1371 = vadd.f32 %v1369, %v1370
    %v1372 = vmul.f32 %v1302, 0.00390625
    %v1373 = vmul.f32 %v1371, 0.00390625
    %v1374 = vld [vmem:[%s5] sm:$0xff]
    %v1375 = vld [vmem:[%s5 + $0x8] sm:$0xff]
    %v1376 = vld [vmem:[%s5 + $0x10] sm:$0xff]
    %v1377 = vld [vmem:[%s5 + $0x18] sm:$0xff]
    %v1378 = vld [vmem:[%s6] sm:$0x1]
    %v1380 = vlaneseq
    %v1381 = vshrl.u32 %v1380, 7
    %v1382 = vsub.s32 0, %v1381
    %v1383 = vrot.slane %v1378, %v1382
    %vm1387 = vcmask 1041409
    %v1388 = vsel %vm1387, %v1373, %v1372
    %v1389 = vsel %vm279, %v1388, 0
    %1391 = vmatprep.subr.mxu0 0.0
    %1392 = vmatpush1.msra.mxu0 %v1374
    %1393 = vmatprep.subr.mxu0 0.0
    %1394 = vmatpush1.msra.mxu0 %v1375
    %1395 = vmatprep.subr.mxu0 0.0
    %1396 = vmatpush1.msra.mxu0 %v1376
    %1397 = vmatprep.subr.mxu0 0.0
    %1398 = vmatpush1.msra.mxu0 %v1377
    %1399 = vmatprep.subr.mxu0 0.0
    %1400 = vmatpush1.msra.mxu0 0.0
    %1401 = vmatprep.subr.mxu0 0.0
    %1402 = vmatpush1.msra.mxu0 0.0
    %1403 = vmatprep.subr.mxu0 0.0
    %1404 = vmatpush1.msra.mxu0 0.0
    %1405 = vmatprep.subr.mxu0 0.0
    %1406 = vmatpush1.msra.mxu0 0.0
    %1407 = vmatprep.subr.mxu0 0.0
    %1408 = vmatpush1.msra.mxu0 0.0
    %1409 = vmatprep.subr.mxu0 0.0
    %1410 = vmatpush1.msra.mxu0 0.0
    %1411 = vmatprep.subr.mxu0 0.0
    %1412 = vmatpush1.msra.mxu0 0.0
    %1413 = vmatprep.subr.mxu0 0.0
    %1414 = vmatpush1.msra.mxu0 0.0
    %1415 = vmatprep.subr.mxu0 0.0
    %1416 = vmatpush1.msra.mxu0 0.0
    %1417 = vmatprep.subr.mxu0 0.0
    %1418 = vmatpush1.msra.mxu0 0.0
    %1419 = vmatprep.subr.mxu0 0.0
    %1420 = vmatpush1.msra.mxu0 0.0
    %1421 = vmatprep.subr.mxu0 0.0
    %1422 = vmatpush1.msra.mxu0 0.0
    %1423 = vmatprep.subr.mxu0 0.0
    %1424 = vmatpush1.msra.mxu0 0.0
    %1425 = vmatprep.subr.mxu0 0.0
    %1426 = vmatpush1.msra.mxu0 0.0
    %1427 = vmatprep.subr.mxu0 0.0
    %1428 = vmatpush1.msra.mxu0 0.0
    %1429 = vmatprep.subr.mxu0 0.0
    %1430 = vmatpush1.msra.mxu0 0.0
    %1431 = vmatprep.subr.mxu0 0.0
    %1432 = vmatpush1.msra.mxu0 0.0
    %1433 = vmatprep.subr.mxu0 0.0
    %1434 = vmatpush1.msra.mxu0 0.0
    %1435 = vmatprep.subr.mxu0 0.0
    %1436 = vmatpush1.msra.mxu0 0.0
    %1437 = vmatprep.subr.mxu0 0.0
    %1438 = vmatpush1.msra.mxu0 0.0
    %1439 = vmatprep.subr.mxu0 0.0
    %1440 = vmatpush1.msra.mxu0 0.0
    %1441 = vmatprep.subr.mxu0 0.0
    %1442 = vmatpush1.msra.mxu0 0.0
    %1443 = vmatprep.subr.mxu0 0.0
    %1444 = vmatpush1.msra.mxu0 0.0
    %1445 = vmatprep.subr.mxu0 0.0
    %1446 = vmatpush1.msra.mxu0 0.0
    %1447 = vmatprep.subr.mxu0 0.0
    %1448 = vmatpush1.msra.mxu0 0.0
    %1449 = vmatprep.subr.mxu0 0.0
    %1450 = vmatpush1.msra.mxu0 0.0
    %1451 = vmatprep.subr.mxu0 0.0
    %1452 = vmatpush1.msra.mxu0 0.0
    %1453 = vmatprep.subr.mxu0 0.0
    %1454 = vmatpush1.msra.mxu0 0.0
    %1455 = vmatprep.mubr.f32.mxu0 0.0
    %1456 = vmatmul.mubr.f32.gmra.mrb[0].mxu0 %v1389
    %v1457 = vpop.f32.mrb[0].mxu0
    %v1458 = vadd.f32 %v1383, %v1457
    %v1459 = vpop.f32.mrb[0].mxu0
    %1460 = vdwg.mxu0
    %vm1461 = vcmask 17408
    %1462 = vst.msk [vmem:[#allocation2] sm:$0x3] %vm1461, %v1458
    %v1463 = vsel %vm1169, %v915, 0.0
    %v1464 = vsel %vm1169, %v918, 0.0
    %v1465 = vadd.f32 %v1463, %v1464
    %v1466 = vsel %vm1169, %v923, 0.0
    %v1467 = vadd.f32 %v1465, %v1466
    %v1468 = vsel %vm1169, %v926, 0.0
    %v1469 = vadd.f32 %v1467, %v1468
    %v1470 = vsel %vm1169, %v931, 0.0
    %v1471 = vadd.f32 %v1469, %v1470
    %v1472 = vsel %vm1169, %v934, 0.0
    %v1473 = vadd.f32 %v1471, %v1472
    %v1474 = vsel %vm1169, %v939, 0.0
    %v1475 = vadd.f32 %v1473, %v1474
    %v1476 = vsel %vm1169, %v942, 0.0
    %v1477 = vadd.f32 %v1475, %v1476
    %v1478 = vsel %vm1169, %v947, 0.0
    %v1479 = vadd.f32 %v1477, %v1478
    %v1480 = vsel %vm1169, %v950, 0.0
    %v1481 = vadd.f32 %v1479, %v1480
    %v1482 = vsel %vm1169, %v955, 0.0
    %v1483 = vadd.f32 %v1481, %v1482
    %v1484 = vsel %vm1169, %v958, 0.0
    %v1485 = vadd.f32 %v1483, %v1484
    %v1486 = vsel %vm1169, %v963, 0.0
    %v1487 = vadd.f32 %v1485, %v1486
    %v1488 = vsel %vm1169, %v966, 0.0
    %v1489 = vadd.f32 %v1487, %v1488
    %v1490 = vsel %vm1169, %v971, 0.0
    %v1491 = vadd.f32 %v1489, %v1490
    %v1492 = vsel %vm1169, %v974, 0.0
    %v1493 = vadd.f32 %v1491, %v1492
    %v1494 = vsel %vm1169, %v979, 0.0
    %v1495 = vadd.f32 %v1493, %v1494
    %v1496 = vsel %vm1169, %v982, 0.0
    %v1497 = vadd.f32 %v1495, %v1496
    %v1498 = vsel %vm1169, %v987, 0.0
    %v1499 = vadd.f32 %v1497, %v1498
    %v1500 = vsel %vm1169, %v990, 0.0
    %v1501 = vadd.f32 %v1499, %v1500
    %v1502 = vsel %vm1169, %v995, 0.0
    %v1503 = vadd.f32 %v1501, %v1502
    %v1504 = vsel %vm1169, %v998, 0.0
    %v1505 = vadd.f32 %v1503, %v1504
    %v1506 = vsel %vm1169, %v1003, 0.0
    %v1507 = vadd.f32 %v1505, %v1506
    %v1508 = vsel %vm1169, %v1006, 0.0
    %v1509 = vadd.f32 %v1507, %v1508
    %v1510 = vsel %vm1169, %v1011, 0.0
    %v1511 = vadd.f32 %v1509, %v1510
    %v1512 = vsel %vm1169, %v1014, 0.0
    %v1513 = vadd.f32 %v1511, %v1512
    %v1514 = vsel %vm1169, %v1019, 0.0
    %v1515 = vadd.f32 %v1513, %v1514
    %v1516 = vsel %vm1169, %v1022, 0.0
    %v1517 = vadd.f32 %v1515, %v1516
    %v1518 = vsel %vm1169, %v1027, 0.0
    %v1519 = vadd.f32 %v1517, %v1518
    %v1520 = vsel %vm1169, %v1030, 0.0
    %v1521 = vadd.f32 %v1519, %v1520
    %v1522 = vsel %vm1169, %v1035, 0.0
    %v1523 = vadd.f32 %v1521, %v1522
    %v1524 = vsel %vm1169, %v1038, 0.0
    %v1525 = vadd.f32 %v1523, %v1524
    %v1526 = vrot.slane %v1525, 4
    %v1527 = vadd.f32 %v1525, %v1526
    %v1528 = vrot.slane %v1527, 2
    %v1529 = vadd.f32 %v1527, %v1528
    %v1530 = vrot.slane %v1529, 1
    %v1531 = vadd.f32 %v1529, %v1530
    %v1532 = vsel %vm1169, %v1043, 0.0
    %v1533 = vsel %vm1169, %v1046, 0.0
    %v1534 = vadd.f32 %v1532, %v1533
    %v1535 = vsel %vm1169, %v1051, 0.0
    %v1536 = vadd.f32 %v1534, %v1535
    %v1537 = vsel %vm1169, %v1054, 0.0
    %v1538 = vadd.f32 %v1536, %v1537
    %v1539 = vsel %vm1169, %v1059, 0.0
    %v1540 = vadd.f32 %v1538, %v1539
    %v1541 = vsel %vm1169, %v1062, 0.0
    %v1542 = vadd.f32 %v1540, %v1541
    %v1543 = vsel %vm1169, %v1067, 0.0
    %v1544 = vadd.f32 %v1542, %v1543
    %v1545 = vsel %vm1169, %v1070, 0.0
    %v1546 = vadd.f32 %v1544, %v1545
    %v1547 = vsel %vm1169, %v1075, 0.0
    %v1548 = vadd.f32 %v1546, %v1547
    %v1549 = vsel %vm1169, %v1078, 0.0
    %v1550 = vadd.f32 %v1548, %v1549
    %v1551 = vsel %vm1169, %v1083, 0.0
    %v1552 = vadd.f32 %v1550, %v1551
    %v1553 = vsel %vm1169, %v1086, 0.0
    %v1554 = vadd.f32 %v1552, %v1553
    %v1555 = vsel %vm1169, %v1091, 0.0
    %v1556 = vadd.f32 %v1554, %v1555
    %v1557 = vsel %vm1169, %v1094, 0.0
    %v1558 = vadd.f32 %v1556, %v1557
    %v1559 = vsel %vm1169, %v1099, 0.0
    %v1560 = vadd.f32 %v1558, %v1559
    %v1561 = vsel %vm1169, %v1102, 0.0
    %v1562 = vadd.f32 %v1560, %v1561
    %v1563 = vsel %vm1169, %v1107, 0.0
    %v1564 = vadd.f32 %v1562, %v1563
    %v1565 = vsel %vm1169, %v1110, 0.0
    %v1566 = vadd.f32 %v1564, %v1565
    %v1567 = vsel %vm1169, %v1115, 0.0
    %v1568 = vadd.f32 %v1566, %v1567
    %v1569 = vsel %vm1169, %v1118, 0.0
    %v1570 = vadd.f32 %v1568, %v1569
    %v1571 = vsel %vm1169, %v1123, 0.0
    %v1572 = vadd.f32 %v1570, %v1571
    %v1573 = vsel %vm1169, %v1126, 0.0
    %v1574 = vadd.f32 %v1572, %v1573
    %v1575 = vsel %vm1169, %v1131, 0.0
    %v1576 = vadd.f32 %v1574, %v1575
    %v1577 = vsel %vm1169, %v1134, 0.0
    %v1578 = vadd.f32 %v1576, %v1577
    %v1579 = vsel %vm1169, %v1139, 0.0
    %v1580 = vadd.f32 %v1578, %v1579
    %v1581 = vsel %vm1169, %v1142, 0.0
    %v1582 = vadd.f32 %v1580, %v1581
    %v1583 = vsel %vm1169, %v1147, 0.0
    %v1584 = vadd.f32 %v1582, %v1583
    %v1585 = vsel %vm1169, %v1150, 0.0
    %v1586 = vadd.f32 %v1584, %v1585
    %v1587 = vsel %vm1169, %v1155, 0.0
    %v1588 = vadd.f32 %v1586, %v1587
    %v1589 = vsel %vm1169, %v1158, 0.0
    %v1590 = vadd.f32 %v1588, %v1589
    %v1591 = vsel %vm1169, %v1163, 0.0
    %v1592 = vadd.f32 %v1590, %v1591
    %v1593 = vsel %vm1169, %v1166, 0.0
    %v1594 = vadd.f32 %v1592, %v1593
    %v1595 = vrot.slane %v1594, 4
    %v1596 = vadd.f32 %v1594, %v1595
    %v1597 = vrot.slane %v1596, 2
    %v1598 = vadd.f32 %v1596, %v1597
    %v1599 = vrot.slane %v1598, 1
    %v1600 = vadd.f32 %v1598, %v1599
    %v1601 = vmul.f32 %v1531, 0.00390625
    %v1602 = vmul.f32 %v1600, 0.00390625
    %v1605 = vsel %vm1387, %v1602, %v1601
    %1606 = vrot.lane.b32.xlu0 %v1605, 68
    %v1607 = vpop.permute.xlu0 %1606
    %vm1609 = vcmask 9216
    %1610 = vst.msk [vmem:[#allocation4] sm:$0x3] %vm1609, %v1607
    // Predicated region
    $region30: #{gdrnppnp_forward.1} parent=1 // pred_check
      _
    $region31: #{gdrnppnp_forward.1} parent=1 // pred_check_branch
      %1612 = sbr.rel (0) target = $region33
    $region32: #{gdrnppnp_forward.1} parent=1 // pred_region
      _
    $region33: #{gdrnppnp_forward.1} parent=1 // pred_fallthru
      _
    // Predicated region
    $region34: #{gdrnppnp_forward.1} parent=1 // pred_check
      _
    $region35: #{gdrnppnp_forward.1} parent=1 // pred_check_branch
      %1614 = sbr.rel (0) target = $region37
    $region36: #{gdrnppnp_forward.1} parent=1 // pred_region
      %s1616 = ssub.s32 32, 32
      %1617 = vsyncadd [#allocation3], %s1616
      %s1619 = sshll.u32 [#allocation2], 4
      %s1620 = int_to_ptr.vmem [resolvable:$true] %s1619
      %1622 = dma.vmem_to_hbm [thread:$0]  %s1620, 32, %s8, [#allocation3]
    $region37: #{gdrnppnp_forward.1} parent=1 // pred_fallthru
      _
    // Predicated region
    $region38: #{gdrnppnp_forward.1} parent=1 // pred_check
      _
    $region39: #{gdrnppnp_forward.1} parent=1 // pred_check_branch
      %1624 = sbr.rel (0) target = $region41
    $region40: #{gdrnppnp_forward.1} parent=1 // pred_region
      %s1626 = ssub.s32 32, 32
      %1627 = vsyncadd [#allocation5], %s1626
      %s1629 = sshll.u32 [#allocation4], 4
      %s1630 = int_to_ptr.vmem [resolvable:$true] %s1629
      %1632 = dma.vmem_to_hbm [thread:$0]  %s1630, 32, %s9, [#allocation5]
    $region41: #{gdrnppnp_forward.1} parent=1 // pred_fallthru
      _
    // Predicated region
    $region42: #{gdrnppnp_forward.1} parent=1 // pred_check
      _
    $region43: #{gdrnppnp_forward.1} parent=1 // pred_check_branch
      %1634 = sbr.rel (0) target = $region45
    $region44: #{gdrnppnp_forward.1} parent=1 // pred_region
      _
    $region45: #{gdrnppnp_forward.1} parent=1 // pred_fallthru
      _
    // Predicated region
    $region46: #{gdrnppnp_forward.1} parent=1 // pred_check
      _
    $region47: #{gdrnppnp_forward.1} parent=1 // pred_check_branch
      %1636 = sbr.rel (0) target = $region49
    $region48: #{gdrnppnp_forward.1} parent=1 // pred_region
      %1637 = dma.done [#allocation3], 32
    $region49: #{gdrnppnp_forward.1} parent=1 // pred_fallthru
      _
    // Predicated region
    $region50: #{gdrnppnp_forward.1} parent=1 // pred_check
      _
    $region51: #{gdrnppnp_forward.1} parent=1 // pred_check_branch
      %1639 = sbr.rel (0) target = $region53
    $region52: #{gdrnppnp_forward.1} parent=1 // pred_region
      %1640 = dma.done [#allocation5], 32
    $region53: #{gdrnppnp_forward.1} parent=1 // pred_fallthru
      _
    %1641 = vsyncpa [#allocation3], 1
    %1642 = vsyncpa [#allocation5], 1

</llo_original>
